<compile_context>
chip_gen: v7x
topology: tpu7x:2x2x1
jax: 0.10.0
libtpu: 0.0.40
codegen_flags: <defaults>
</compile_context>

<pallas_src>
import functools
import math

import jax
import jax.numpy as jnp
from jax import lax
from jax.experimental import pallas as pl
from jax.experimental.pallas import tpu as pltpu


_NEG_BIG = -1e30  # finite "-inf" stand-in (avoids inf-inf -> NaN in the online max)


def _softsupcon_tile_kernel(*refs, temperature, base_temperature, n_valid, use_labels):
    """Streaming SupCon tile kernel.

    Per-row VMEM scratch carried across column tiles:
      m   : running max of logits over valid, non-diagonal columns
      d   : running sum of exp(logits - m) over valid, non-diagonal columns
      sml : running sum of mask * logits
      sm  : running sum of mask
    Final per-row loss = -(T/Tb) * (sml/sm - (m + log d)), guarded for rows with
    no positives (and padded rows).
    """
    if use_labels:
        (row_lab_ref, col_lab_ref, q_ref, k_ref,
         o_ref, m_ref, d_ref, sml_ref, sm_ref) = refs
    else:
        (mask_ref, q_ref, k_ref,
         o_ref, m_ref, d_ref, sml_ref, sm_ref) = refs

    i = pl.program_id(0)
    j = pl.program_id(1)
    last_j = pl.num_programs(1) - 1
    tr = q_ref.shape[0]
    tc = k_ref.shape[0]

    @pl.when(j == 0)
    def _init():
        m_ref[...] = jnp.full(m_ref.shape, _NEG_BIG, m_ref.dtype)
        d_ref[...] = jnp.zeros(d_ref.shape, d_ref.dtype)
        sml_ref[...] = jnp.zeros(sml_ref.shape, sml_ref.dtype)
        sm_ref[...] = jnp.zeros(sm_ref.shape, sm_ref.dtype)

    # [TR, TC] logits tile on the MXU; contraction on the feature axis of both
    # operands (no explicit transpose / no feat.T copy).
    adc = lax.dot_general(
        q_ref[...], k_ref[...],
        dimension_numbers=(((1,), (1,)), ((), ())),
        preferred_element_type=jnp.float32,
    ) * jnp.float32(1.0 / temperature)

    row0 = i * tr
    col0 = j * tc
    row_idx = row0 + lax.broadcasted_iota(jnp.int32, (tr, tc), 0)
    col_idx = col0 + lax.broadcasted_iota(jnp.int32, (tr, tc), 1)
    valid_col = col_idx < n_valid
    include = jnp.logical_and(valid_col, row_idx != col_idx)   # drop padding + diag
    include_f = include.astype(jnp.float32)

    if use_labels:
        mask_tile = (row_lab_ref[...] == col_lab_ref[...]).astype(jnp.float32) * include_f
    else:
        mask_tile = mask_ref[...] * include_f

    # ---- online log-sum-exp over valid, non-diagonal columns ----
    adc_m = jnp.where(include, adc, _NEG_BIG)
    tile_max = jnp.max(adc_m, axis=1, keepdims=True)
    m_old = m_ref[...]
    m_new = jnp.maximum(m_old, tile_max)
    alpha = jnp.exp(m_old - m_new)
    p = jnp.exp(adc_m - m_new) * include_f
    d_ref[...] = alpha * d_ref[...] + jnp.sum(p, axis=1, keepdims=True)
    m_ref[...] = m_new

    # ---- mask-weighted sums (mask already excludes diag / padding) ----
    sml_ref[...] += jnp.sum(mask_tile * adc, axis=1, keepdims=True)
    sm_ref[...] += jnp.sum(mask_tile, axis=1, keepdims=True)

    @pl.when(j == last_j)
    def _finalize():
        s_m = sm_ref[...]
        lse = m_ref[...] + jnp.log(d_ref[...])               # LSE over non-diag cols
        mean_log_prob_pos = sml_ref[...] / s_m - lse
        loss_row = jnp.float32(-(temperature / base_temperature)) * mean_log_prob_pos
        valid_row = (row0 + lax.broadcasted_iota(jnp.int32, (tr, 1), 0)) < n_valid
        # Guard rows with zero positives (and padded rows) against 0/0 -> NaN.
        o_ref[...] = jnp.where(jnp.logical_and(valid_row, s_m > 0.0), loss_row, 0.0)


def soft_sup_con_loss(features, labels=None, soft_mask=None,
                      temperature=0.07, contrast_mode='all', base_temperature=0.07,
                      tile_rows=128, tile_cols=128):
    """JAX/Pallas forward pass of SoftSupConLoss (contrast_mode='all')."""
    if features.ndim < 3:
        raise ValueError('`features` needs to be [bsz, n_views, ...]')
    if features.ndim > 3:
        features = features.reshape(features.shape[0], features.shape[1], -1)
    if contrast_mode != 'all':
        # TODO(synk): add contrast_mode='one' (anchor = view 0 only) if needed.
        raise ValueError('Only contrast_mode="all" is implemented')
    if labels is not None and soft_mask is not None:
        raise ValueError('Cannot define both `labels` and `mask`')

    bsz, n_views, d = features.shape
    n = n_views * bsz

    # contrast feature = torch.cat(torch.unbind(features, dim=1), dim=0): view-major [N, D]
    contrast_feature = jnp.transpose(features, (1, 0, 2)).reshape(n, d).astype(jnp.float32)

    # Pad N to a multiple of both tile sizes, D to a lane-dense multiple of 128.
    lcm = tile_rows * tile_cols // math.gcd(tile_rows, tile_cols)
    n_pad = ((n + lcm - 1) // lcm) * lcm
    d_pad = max(128, ((d + 127) // 128) * 128)
    feat_p = jnp.zeros((n_pad, d_pad), jnp.float32).at[:n, :d].set(contrast_feature)
    # TODO(synk): optionally cast feat_p to bf16 for 2x MXU throughput / half the feature
    # DMA; temperature=0.07 amplifies rounding, so validate tolerance before enabling.

    grid = (n_pad // tile_rows, n_pad // tile_cols)
    q_spec = pl.BlockSpec((tile_rows, d_pad), lambda i, j: (i, 0))
    k_spec = pl.BlockSpec((tile_cols, d_pad), lambda i, j: (j, 0))
    out_spec = pl.BlockSpec((tile_rows, 1), lambda i, j: (i, 0))
    scratch = [pltpu.VMEM((tile_rows, 1), jnp.float32)] * 4
    cparams = pltpu.CompilerParams(dimension_semantics=("parallel", "arbitrary"))

    use_labels = soft_mask is None
    if use_labels:
        if labels is None:
            # SimCLR default eye(bsz) mask == "each sample is its own class".
            labels = jnp.arange(bsz, dtype=jnp.int32)
        labels = labels.reshape(-1).astype(jnp.int32)
        if labels.shape[0] != bsz:
            raise ValueError('Num of labels does not match num of features')
        lab_rep = jnp.tile(labels, n_views)                     # view-major [N]
        lab_pad = jnp.full((n_pad,), -1, jnp.int32).at[:n].set(lab_rep)
        row_lab = lab_pad.reshape(n_pad, 1)
        col_lab = lab_pad.reshape(1, n_pad)
        in_specs = [
            pl.BlockSpec((tile_rows, 1), lambda i, j: (i, 0)),   # row-tile labels
            pl.BlockSpec((1, tile_cols), lambda i, j: (0, j)),   # col-tile labels
            q_spec, k_spec,
        ]
        inputs = (row_lab, col_lab, feat_p, feat_p)
    else:
        # Arbitrary (possibly asymmetric) soft mask: stream a pre-tiled padded mask
        # tile-by-tile (VMEM stays O(TILE^2); HBM traffic is n_views^2-redundant).
        # TODO(synk): when tile sizes divide bsz, stream the untiled [bsz,bsz] mask
        # via a modulo index_map instead of materializing the tiled mask.
        soft_mask = soft_mask.astype(jnp.float32)
        mask_rep = jnp.tile(soft_mask, (n_views, n_views))
        mask_p = jnp.zeros((n_pad, n_pad), jnp.float32).at[:n, :n].set(mask_rep)
        in_specs = [pl.BlockSpec((tile_rows, tile_cols), lambda i, j: (i, j)),
                    q_spec, k_spec]
        inputs = (mask_p, feat_p, feat_p)

    kernel = functools.partial(
        _softsupcon_tile_kernel,
        temperature=float(temperature),
        base_temperature=float(base_temperature),
        n_valid=int(n),
        use_labels=use_labels,
    )

    per_row_loss = pl.pallas_call(
        kernel,
        out_shape=jax.ShapeDtypeStruct((n_pad, 1), jnp.float32),
        grid_spec=pltpu.PrefetchScalarGridSpec(
            num_scalar_prefetch=0,
            grid=grid,
            in_specs=in_specs,
            out_specs=out_spec,
            scratch_shapes=scratch,
        ),
        compiler_params=cparams,
    )(*inputs)

    # TODO(synk): forward only; wrap in jax.custom_vjp (or add a backward kernel) for training.
    # loss.view(anchor_count, batch_size).mean() == mean over all N anchors.
    return jnp.sum(per_row_loss) / jnp.float32(n)


def _reference_loss(features, labels=None, soft_mask=None,
                    temperature=0.07, base_temperature=0.07):
    """Pure-JAX reference mirroring the PyTorch forward exactly."""
    bsz, n_views, d = features.shape
    if labels is None and soft_mask is None:
        soft_mask = jnp.eye(bsz, dtype=jnp.float32)
    elif labels is not None:
        labels = labels.reshape(-1, 1)
        soft_mask = (labels == labels.T).astype(jnp.float32)
    else:
        soft_mask = soft_mask.astype(jnp.float32)
    n = n_views * bsz
    contrast_feature = jnp.transpose(features, (1, 0, 2)).reshape(n, d).astype(jnp.float32)
    adc = (contrast_feature @ contrast_feature.T) / temperature
    logits = adc - jnp.max(adc, axis=1, keepdims=True)
    mask = jnp.tile(soft_mask, (n_views, n_views))
    logits_mask = 1.0 - jnp.eye(n, dtype=jnp.float32)
    mask = mask * logits_mask
    exp_logits = jnp.exp(logits) * logits_mask
    log_prob = logits - jnp.log(jnp.sum(exp_logits, axis=1, keepdims=True))
    mean_log_prob_pos = jnp.sum(mask * log_prob, axis=1) / jnp.sum(mask, axis=1)
    loss = -(temperature / base_temperature) * mean_log_prob_pos
    return jnp.mean(loss)


if __name__ == "__main__":
    key = jax.random.PRNGKey(0)
    ks = jax.random.split(key, 8)

    def _check(feats, labels=None, soft_mask=None, tol=1e-4):
        got = soft_sup_con_loss(feats, labels=labels, soft_mask=soft_mask)
        got = jax.block_until_ready(got)
        want = _reference_loss(feats, labels=labels, soft_mask=soft_mask)
        assert bool(jnp.isfinite(got)), got
        assert jnp.allclose(got, want, rtol=tol, atol=tol), (got, want)

    def _feats(k, bsz, n_views, d):
        f = jax.random.normal(k, (bsz, n_views, d), dtype=jnp.float32)
        return f / jnp.linalg.norm(f, axis=-1, keepdims=True)

    # 1) labels path, small (single 128x128 tile after padding)
    f = _feats(ks[0], 8, 2, 32)
    lab = jax.random.randint(ks[1], (8,), 0, 3)
    _check(f, labels=lab)

    # 2) labels path, multi-tile grid: N = 192 -> padded 256 -> 2x2 grid; D 48 -> 128
    f = _feats(ks[2], 96, 2, 48)
    lab = jax.random.randint(ks[3], (96,), 0, 5)
    _check(f, labels=lab)

    # 3) SimCLR default (no labels / no mask)
    f = _feats(ks[4], 8, 2, 32)
    _check(f)

    # 4) explicit soft-mask path
    f = _feats(ks[5], 8, 2, 32)
    sm = jax.random.uniform(ks[6], (8, 8), dtype=jnp.float32) + 0.05
    _check(f, soft_mask=sm)

    print("KERNEL_OK")
</pallas_src>

<mosaic_0001>
module attributes {stable_mosaic.version = 11 : i64} {
  func.func @_softsupcon_tile_kernel(%arg0: i32, %arg1: i32, %arg2: memref<128x1xi32, #tpu.memory_space<vmem>>, %arg3: memref<1x128xi32, #tpu.memory_space<vmem>>, %arg4: memref<128x128xf32, #tpu.memory_space<vmem>>, %arg5: memref<128x128xf32, #tpu.memory_space<vmem>>, %arg6: memref<128x1xf32, #tpu.memory_space<vmem>>, %arg7: memref<128x1xf32, #tpu.memory_space<vmem>>, %arg8: memref<128x1xf32, #tpu.memory_space<vmem>>, %arg9: memref<128x1xf32, #tpu.memory_space<vmem>>, %arg10: memref<128x1xf32, #tpu.memory_space<vmem>>) attributes {dimension_semantics = [#tpu.dimension_semantics<parallel>, #tpu.dimension_semantics<arbitrary>], iteration_bounds = array<i64: 1, 1>, scalar_prefetch = 0 : i64, scratch_operands = 4 : i64, tpu.core_type = #tpu.core_type<tc>, window_params = [{transform_indices = @transform_0, window_bounds = array<i64: 128, 1>}, {transform_indices = @transform_1, window_bounds = array<i64: 1, 128>}, {transform_indices = @transform_2, window_bounds = array<i64: 128, 128>}, {transform_indices = @transform_3, window_bounds = array<i64: 128, 128>}, {transform_indices = @transform_4, window_bounds = array<i64: 128, 1>}]} {
    %c0_i32 = arith.constant 0 : i32
    %0 = arith.cmpi eq, %arg1, %c0_i32 : i32
    %1 = arith.extui %0 : i1 to i32
    %c0_i32_0 = arith.constant 0 : i32
    %2 = arith.cmpi ne, %1, %c0_i32_0 : i32
    scf.if %2 {
      %cst_33 = arith.constant -1.000000e+30 : f32
      %63 = vector.broadcast %cst_33 : f32 to vector<128x1xf32>
      %c0_34 = arith.constant 0 : index
      %c0_35 = arith.constant 0 : index
      %64 = vector.load %arg7[%c0_34, %c0_35] : memref<128x1xf32, #tpu.memory_space<vmem>>, vector<128x1xf32>
      tpu.vector_store %arg7[%c0_34, %c0_35], %63 {strides = array<i32>} : memref<128x1xf32, #tpu.memory_space<vmem>>, vector<128x1xf32>,
      %cst_36 = arith.constant 0.000000e+00 : f32
      %65 = vector.broadcast %cst_36 : f32 to vector<128x1xf32>
      %c0_37 = arith.constant 0 : index
      %c0_38 = arith.constant 0 : index
      %66 = vector.load %arg8[%c0_37, %c0_38] : memref<128x1xf32, #tpu.memory_space<vmem>>, vector<128x1xf32>
      tpu.vector_store %arg8[%c0_37, %c0_38], %65 {strides = array<i32>} : memref<128x1xf32, #tpu.memory_space<vmem>>, vector<128x1xf32>,
      %cst_39 = arith.constant 0.000000e+00 : f32
      %67 = vector.broadcast %cst_39 : f32 to vector<128x1xf32>
      %c0_40 = arith.constant 0 : index
      %c0_41 = arith.constant 0 : index
      %68 = vector.load %arg9[%c0_40, %c0_41] : memref<128x1xf32, #tpu.memory_space<vmem>>, vector<128x1xf32>
      tpu.vector_store %arg9[%c0_40, %c0_41], %67 {strides = array<i32>} : memref<128x1xf32, #tpu.memory_space<vmem>>, vector<128x1xf32>,
      %cst_42 = arith.constant 0.000000e+00 : f32
      %69 = vector.broadcast %cst_42 : f32 to vector<128x1xf32>
      %c0_43 = arith.constant 0 : index
      %c0_44 = arith.constant 0 : index
      %70 = vector.load %arg10[%c0_43, %c0_44] : memref<128x1xf32, #tpu.memory_space<vmem>>, vector<128x1xf32>
      tpu.vector_store %arg10[%c0_43, %c0_44], %69 {strides = array<i32>} : memref<128x1xf32, #tpu.memory_space<vmem>>, vector<128x1xf32>,
    } else {
    }
    %c0 = arith.constant 0 : index
    %c0_1 = arith.constant 0 : index
    %3 = vector.load %arg4[%c0, %c0_1] : memref<128x128xf32, #tpu.memory_space<vmem>>, vector<128x128xf32>
    %c0_2 = arith.constant 0 : index
    %c0_3 = arith.constant 0 : index
    %4 = vector.load %arg5[%c0_2, %c0_3] : memref<128x128xf32, #tpu.memory_space<vmem>>, vector<128x128xf32>
    %cst = arith.constant dense<0.000000e+00> : vector<128x128xf32>
    %5 = tpu.matmul %3, %4, %cst {dimension_numbers = #tpu.dot_dimension_numbers<[1], [1], [0], [0], [0, 0, 1, 0], [], []>} : vector<128x128xf32>, vector<128x128xf32>, vector<128x128xf32> -> vector<128x128xf32>
    %cst_4 = arith.constant 14.2857141 : f32
    %6 = vector.broadcast %cst_4 : f32 to vector<128x128xf32>
    %7 = arith.mulf %5, %6 : vector<128x128xf32>
    %c128_i32 = arith.constant 128 : i32
    %8 = arith.muli %arg0, %c128_i32 : i32
    %c128_i32_5 = arith.constant 128 : i32
    %9 = arith.muli %arg1, %c128_i32_5 : i32
    %10 = tpu.iota {dimensions = array<i32: 0>} : vector<128x128xi32>
    %11 = vector.broadcast %8 : i32 to vector<128x128xi32>
    %12 = arith.addi %11, %10 : vector<128x128xi32>
    %13 = tpu.iota {dimensions = array<i32: 1>} : vector<128x128xi32>
    %14 = vector.broadcast %9 : i32 to vector<128x128xi32>
    %15 = arith.addi %14, %13 : vector<128x128xi32>
    %c16_i32 = arith.constant 16 : i32
    %16 = vector.broadcast %c16_i32 : i32 to vector<128x128xi32>
    %17 = arith.cmpi slt, %15, %16 : vector<128x128xi32>
    %18 = arith.cmpi ne, %12, %15 : vector<128x128xi32>
    %19 = arith.andi %17, %18 : vector<128x128xi1>
    %20 = arith.extui %19 : vector<128x128xi1> to vector<128x128xi32>
    %21 = arith.sitofp %20 : vector<128x128xi32> to vector<128x128xf32>
    %c0_6 = arith.constant 0 : index
    %c0_7 = arith.constant 0 : index
    %22 = vector.load %arg2[%c0_6, %c0_7] : memref<128x1xi32, #tpu.memory_space<vmem>>, vector<128x1xi32>
    %c0_8 = arith.constant 0 : index
    %c0_9 = arith.constant 0 : index
    %23 = vector.load %arg3[%c0_8, %c0_9] : memref<1x128xi32, #tpu.memory_space<vmem>>, vector<1x128xi32>
    %24 = vector.broadcast %22 : vector<128x1xi32> to vector<128x128xi32>
    %25 = vector.broadcast %23 : vector<1x128xi32> to vector<128x128xi32>
    %26 = arith.cmpi eq, %24, %25 : vector<128x128xi32>
    %27 = arith.extui %26 : vector<128x128xi1> to vector<128x128xi32>
    %28 = arith.sitofp %27 : vector<128x128xi32> to vector<128x128xf32>
    %29 = arith.mulf %28, %21 : vector<128x128xf32>
    %cst_10 = arith.constant -1.000000e+30 : f32
    %30 = vector.broadcast %cst_10 : f32 to vector<128x128xf32>
    %31 = arith.select %19, %7, %30 : vector<128x128xi1>, vector<128x128xf32>
    %cst_11 = arith.constant dense<0xFF800000> : vector<128xf32>
    %32 = vector.multi_reduction <maximumf>, %31, %cst_11 [1] : vector<128x128xf32> to vector<128xf32>
    %33 = vector.shape_cast %32 : vector<128xf32> to vector<128x1xf32>
    %c0_12 = arith.constant 0 : index
    %c0_13 = arith.constant 0 : index
    %34 = vector.load %arg7[%c0_12, %c0_13] : memref<128x1xf32, #tpu.memory_space<vmem>>, vector<128x1xf32>
    %35 = arith.maximumf %34, %33 : vector<128x1xf32>
    %36 = arith.subf %34, %35 : vector<128x1xf32>
    %37 = math.exp %36 : vector<128x1xf32>
    %38 = vector.broadcast %35 : vector<128x1xf32> to vector<128x128xf32>
    %39 = arith.subf %31, %38 : vector<128x128xf32>
    %40 = math.exp %39 : vector<128x128xf32>
    %41 = arith.mulf %40, %21 : vector<128x128xf32>
    %c0_14 = arith.constant 0 : index
    %c0_15 = arith.constant 0 : index
    %42 = vector.load %arg8[%c0_14, %c0_15] : memref<128x1xf32, #tpu.memory_space<vmem>>, vector<128x1xf32>
    %43 = arith.mulf %37, %42 : vector<128x1xf32>
    %cst_16 = arith.constant dense<0.000000e+00> : vector<128xf32>
    %44 = vector.multi_reduction <add>, %41, %cst_16 [1] : vector<128x128xf32> to vector<128xf32>
    %45 = vector.shape_cast %44 : vector<128xf32> to vector<128x1xf32>
    %46 = arith.addf %43, %45 : vector<128x1xf32>
    %c0_17 = arith.constant 0 : index
    %c0_18 = arith.constant 0 : index
    %47 = vector.load %arg8[%c0_17, %c0_18] : memref<128x1xf32, #tpu.memory_space<vmem>>, vector<128x1xf32>
    tpu.vector_store %arg8[%c0_17, %c0_18], %46 {strides = array<i32>} : memref<128x1xf32, #tpu.memory_space<vmem>>, vector<128x1xf32>,
    %c0_19 = arith.constant 0 : index
    %c0_20 = arith.constant 0 : index
    %48 = vector.load %arg7[%c0_19, %c0_20] : memref<128x1xf32, #tpu.memory_space<vmem>>, vector<128x1xf32>
    tpu.vector_store %arg7[%c0_19, %c0_20], %35 {strides = array<i32>} : memref<128x1xf32, #tpu.memory_space<vmem>>, vector<128x1xf32>,
    %c0_21 = arith.constant 0 : index
    %c0_22 = arith.constant 0 : index
    %49 = vector.load %arg9[%c0_21, %c0_22] : memref<128x1xf32, #tpu.memory_space<vmem>>, vector<128x1xf32>
    %50 = arith.mulf %29, %7 : vector<128x128xf32>
    %cst_23 = arith.constant dense<0.000000e+00> : vector<128xf32>
    %51 = vector.multi_reduction <add>, %50, %cst_23 [1] : vector<128x128xf32> to vector<128xf32>
    %52 = vector.shape_cast %51 : vector<128xf32> to vector<128x1xf32>
    %53 = arith.addf %49, %52 : vector<128x1xf32>
    %c0_24 = arith.constant 0 : index
    %c0_25 = arith.constant 0 : index
    %54 = vector.load %arg9[%c0_24, %c0_25] : memref<128x1xf32, #tpu.memory_space<vmem>>, vector<128x1xf32>
    tpu.vector_store %arg9[%c0_24, %c0_25], %53 {strides = array<i32>} : memref<128x1xf32, #tpu.memory_space<vmem>>, vector<128x1xf32>,
    %c0_26 = arith.constant 0 : index
    %c0_27 = arith.constant 0 : index
    %55 = vector.load %arg10[%c0_26, %c0_27] : memref<128x1xf32, #tpu.memory_space<vmem>>, vector<128x1xf32>
    %cst_28 = arith.constant dense<0.000000e+00> : vector<128xf32>
    %56 = vector.multi_reduction <add>, %29, %cst_28 [1] : vector<128x128xf32> to vector<128xf32>
    %57 = vector.shape_cast %56 : vector<128xf32> to vector<128x1xf32>
    %58 = arith.addf %55, %57 : vector<128x1xf32>
    %c0_29 = arith.constant 0 : index
    %c0_30 = arith.constant 0 : index
    %59 = vector.load %arg10[%c0_29, %c0_30] : memref<128x1xf32, #tpu.memory_space<vmem>>, vector<128x1xf32>
    tpu.vector_store %arg10[%c0_29, %c0_30], %58 {strides = array<i32>} : memref<128x1xf32, #tpu.memory_space<vmem>>, vector<128x1xf32>,
    %c0_i32_31 = arith.constant 0 : i32
    %60 = arith.cmpi eq, %arg1, %c0_i32_31 : i32
    %61 = arith.extui %60 : i1 to i32
    %c0_i32_32 = arith.constant 0 : i32
    %62 = arith.cmpi ne, %61, %c0_i32_32 : i32
    scf.if %62 {
      %c0_33 = arith.constant 0 : index
      %c0_34 = arith.constant 0 : index
      %63 = vector.load %arg10[%c0_33, %c0_34] : memref<128x1xf32, #tpu.memory_space<vmem>>, vector<128x1xf32>
      %c0_35 = arith.constant 0 : index
      %c0_36 = arith.constant 0 : index
      %64 = vector.load %arg7[%c0_35, %c0_36] : memref<128x1xf32, #tpu.memory_space<vmem>>, vector<128x1xf32>
      %c0_37 = arith.constant 0 : index
      %c0_38 = arith.constant 0 : index
      %65 = vector.load %arg8[%c0_37, %c0_38] : memref<128x1xf32, #tpu.memory_space<vmem>>, vector<128x1xf32>
      %66 = math.log %65 : vector<128x1xf32>
      %67 = arith.addf %64, %66 : vector<128x1xf32>
      %c0_39 = arith.constant 0 : index
      %c0_40 = arith.constant 0 : index
      %68 = vector.load %arg9[%c0_39, %c0_40] : memref<128x1xf32, #tpu.memory_space<vmem>>, vector<128x1xf32>
      %69 = arith.divf %68, %63 : vector<128x1xf32>
      %70 = arith.subf %69, %67 : vector<128x1xf32>
      %cst_41 = arith.constant -1.000000e+00 : f32
      %71 = vector.broadcast %cst_41 : f32 to vector<128x1xf32>
      %72 = arith.mulf %71, %70 : vector<128x1xf32>
      %73 = tpu.iota {dimensions = array<i32: 0>} : vector<128x1xi32>
      %74 = vector.broadcast %8 : i32 to vector<128x1xi32>
      %75 = arith.addi %74, %73 : vector<128x1xi32>
      %c16_i32_42 = arith.constant 16 : i32
      %76 = vector.broadcast %c16_i32_42 : i32 to vector<128x1xi32>
      %77 = arith.cmpi slt, %75, %76 : vector<128x1xi32>
      %cst_43 = arith.constant 0.000000e+00 : f32
      %78 = vector.broadcast %cst_43 : f32 to vector<128x1xf32>
      %79 = arith.cmpf ogt, %63, %78 : vector<128x1xf32>
      %80 = arith.andi %77, %79 : vector<128x1xi1>
      %cst_44 = arith.constant 0.000000e+00 : f32
      %81 = vector.broadcast %cst_44 : f32 to vector<128x1xf32>
      %82 = arith.select %80, %72, %81 : vector<128x1xi1>, vector<128x1xf32>
      %c0_45 = arith.constant 0 : index
      %c0_46 = arith.constant 0 : index
      %83 = vector.load %arg6[%c0_45, %c0_46] : memref<128x1xf32, #tpu.memory_space<vmem>>, vector<128x1xf32>
      tpu.vector_store %arg6[%c0_45, %c0_46], %82 {strides = array<i32>} : memref<128x1xf32, #tpu.memory_space<vmem>>, vector<128x1xf32>,
    } else {
    }
    return
  }
  func.func @transform_0(%arg0: i32, %arg1: i32) -> (i32, i32) {
    %c0_i32 = arith.constant 0 : i32
    %c0_i32_0 = arith.constant 0 : i32
    return %arg0, %c0_i32 : i32, i32
  }
  func.func @transform_1(%arg0: i32, %arg1: i32) -> (i32, i32) {
    %c0_i32 = arith.constant 0 : i32
    %c0_i32_0 = arith.constant 0 : i32
    return %c0_i32, %arg1 : i32, i32
  }
  func.func @transform_2(%arg0: i32, %arg1: i32) -> (i32, i32) {
    %c0_i32 = arith.constant 0 : i32
    %c0_i32_0 = arith.constant 0 : i32
    return %arg0, %c0_i32 : i32, i32
  }
  func.func @transform_3(%arg0: i32, %arg1: i32) -> (i32, i32) {
    %c0_i32 = arith.constant 0 : i32
    %c0_i32_0 = arith.constant 0 : i32
    return %arg1, %c0_i32 : i32, i32
  }
  func.func @transform_4(%arg0: i32, %arg1: i32) -> (i32, i32) {
    %c0_i32 = arith.constant 0 : i32
    %c0_i32_0 = arith.constant 0 : i32
    return %arg0, %c0_i32 : i32, i32
  }
}

</mosaic_0001>

<llo_original>
// kernel: tpu_custom_call.1
$region0: #{tpu_custom_call.1}
  #allocation0 [shape = 'u32[]', space=smem, size = 0x4, offset = 0x4, fixed_abs, tag = 'smem constant byte address 0x4 - core index']
  #allocation1 [shape = 'u32[144,128]{1,0:T(1,128)}', space=vmem, size = 0x12000, scoped, tag = 'internal scratch']
  #allocation2 [shape = 'f32[128,1]{1,0:T(8,128)}', space=vmem, size = 0x10000, scoped, tag = 'scratch operand']
  #allocation3 [shape = 'f32[128,1]{1,0:T(8,128)}', space=vmem, size = 0x10000, scoped, tag = 'scratch operand']
  #allocation4 [shape = 'f32[128,1]{1,0:T(8,128)}', space=vmem, size = 0x10000, scoped, tag = 'scratch operand']
  #allocation5 [shape = 'f32[128,1]{1,0:T(8,128)}', space=vmem, size = 0x10000, scoped, tag = 'scratch operand']
  %s0 = inlined_call_operand.vmem [shape: s32[128,1], index: 0, kind: input, shape index: {}]
  %s1 = inlined_call_operand.vmem [shape: s32[1,128], index: 1, kind: input, shape index: {}]
  %s2 = inlined_call_operand.vmem [shape: f32[128,128], index: 2, kind: input, shape index: {}]
  %s3 = inlined_call_operand.hbm [shape: f32[128,128], index: 3, kind: input, shape index: {}]
  %s4 = inlined_call_operand.vmem [shape: f32[128,1], index: 4, kind: output, shape index: {}]
  %s5 = sld [smem:[#allocation0]]
  $region38: #{tpu_custom_call.1} parent=0
    _
  %s7 = ssub.s32 1, %s5
  %s8 = scalar_select 0, %s7, %s5
  $region1: #{tpu_custom_call.1} parent=0
    #allocation6 [shape = 'u8[65536]{0}', space=vmem, size = 0x10000, scoped, tag = 'input window, operand 3, single buffered']
    #allocation7 [shape = 's32[1]{0}', space=sflag, size = 0x4, scoped, tag = 'scoped memory for tpu_custom_call.1']
    %9 = vsyncpa [#allocation7], 0
    // Predicated region
    $region2: #{tpu_custom_call.1} parent=1 // pred_check
      _
    $region3: #{tpu_custom_call.1} parent=1 // pred_check_branch
      %11 = sbr.rel (0) target = $region5
    $region4: #{tpu_custom_call.1} parent=1 // pred_region
      _
    $region5: #{tpu_custom_call.1} parent=1 // pred_fallthru
      _
    // Predicated region
    $region6: #{tpu_custom_call.1} parent=1 // pred_check
      _
    $region7: #{tpu_custom_call.1} parent=1 // pred_check_branch
      %13 = sbr.rel (0) target = $region9
    $region8: #{tpu_custom_call.1} parent=1 // pred_region
      _
    $region9: #{tpu_custom_call.1} parent=1 // pred_fallthru
      _
    // Predicated region
    $region10: #{tpu_custom_call.1} parent=1 // pred_check
      _
    $region11: #{tpu_custom_call.1} parent=1 // pred_check_branch
      %15 = sbr.rel (0) target = $region13
    $region12: #{tpu_custom_call.1} parent=1 // pred_region
      _
    $region13: #{tpu_custom_call.1} parent=1 // pred_fallthru
      _
    // Predicated region
    $region14: #{tpu_custom_call.1} parent=1 // pred_check
      _
    $region15: #{tpu_custom_call.1} parent=1 // pred_check_branch
      %17 = sbr.rel (0) target = $region17
    $region16: #{tpu_custom_call.1} parent=1 // pred_region
      %s19 = ssub.s32 2048, 2048
      %20 = vsyncadd [#allocation7], %s19
      %s21 = sshll.u32 [#allocation6], 4
      %s22 = int_to_ptr.vmem [resolvable:$true] %s21
      %27 = dma.hbm_to_vmem [thread:$0]  %s3, 2048, %s22, [#allocation7], 128, 128, 8
    $region17: #{tpu_custom_call.1} parent=1 // pred_fallthru
      _
    // Predicated region
    $region18: #{tpu_custom_call.1} parent=1 // pred_check
      _
    $region19: #{tpu_custom_call.1} parent=1 // pred_check_branch
      %29 = sbr.rel (0) target = $region21
    $region20: #{tpu_custom_call.1} parent=1 // pred_region
      %30 = dma.done [#allocation7], 2048
    $region21: #{tpu_custom_call.1} parent=1 // pred_fallthru
      _
    %p31 = scmp.eq.s32.totalorder 0, 0
    // Predicated region
    $region22: #{tpu_custom_call.1} parent=1 // pred_check
      %p32 = pneg %p31
    $region23: #{tpu_custom_call.1} parent=1 // pred_check_branch
      %34 = sbr.rel (%p32) target = $region25
    $region24: #{tpu_custom_call.1} parent=1 // pred_region
      %vm35 = vcmask 7168
      %36 = vst.msk [vmem:[#allocation2] sm:$0xff] %vm35, -1e+30
      %37 = vst.msk [vmem:[#allocation2 + $0x8] sm:$0xff] %vm35, -1e+30
      %38 = vst.msk [vmem:[#allocation2 + $0x10] sm:$0xff] %vm35, -1e+30
      %39 = vst.msk [vmem:[#allocation2 + $0x18] sm:$0xff] %vm35, -1e+30
      %40 = vst.msk [vmem:[#allocation2 + $0x20] sm:$0xff] %vm35, -1e+30
      %41 = vst.msk [vmem:[#allocation2 + $0x28] sm:$0xff] %vm35, -1e+30
      %42 = vst.msk [vmem:[#allocation2 + $0x30] sm:$0xff] %vm35, -1e+30
      %43 = vst.msk [vmem:[#allocation2 + $0x38] sm:$0xff] %vm35, -1e+30
      %44 = vst.msk [vmem:[#allocation2 + $0x40] sm:$0xff] %vm35, -1e+30
      %45 = vst.msk [vmem:[#allocation2 + $0x48] sm:$0xff] %vm35, -1e+30
      %46 = vst.msk [vmem:[#allocation2 + $0x50] sm:$0xff] %vm35, -1e+30
      %47 = vst.msk [vmem:[#allocation2 + $0x58] sm:$0xff] %vm35, -1e+30
      %48 = vst.msk [vmem:[#allocation2 + $0x60] sm:$0xff] %vm35, -1e+30
      %49 = vst.msk [vmem:[#allocation2 + $0x68] sm:$0xff] %vm35, -1e+30
      %50 = vst.msk [vmem:[#allocation2 + $0x70] sm:$0xff] %vm35, -1e+30
      %51 = vst.msk [vmem:[#allocation2 + $0x78] sm:$0xff] %vm35, -1e+30
      %52 = vst.msk [vmem:[#allocation3] sm:$0xff] %vm35, 0.0
      %53 = vst.msk [vmem:[#allocation3 + $0x8] sm:$0xff] %vm35, 0.0
      %54 = vst.msk [vmem:[#allocation3 + $0x10] sm:$0xff] %vm35, 0.0
      %55 = vst.msk [vmem:[#allocation3 + $0x18] sm:$0xff] %vm35, 0.0
      %56 = vst.msk [vmem:[#allocation3 + $0x20] sm:$0xff] %vm35, 0.0
      %57 = vst.msk [vmem:[#allocation3 + $0x28] sm:$0xff] %vm35, 0.0
      %58 = vst.msk [vmem:[#allocation3 + $0x30] sm:$0xff] %vm35, 0.0
      %59 = vst.msk [vmem:[#allocation3 + $0x38] sm:$0xff] %vm35, 0.0
      %60 = vst.msk [vmem:[#allocation3 + $0x40] sm:$0xff] %vm35, 0.0
      %61 = vst.msk [vmem:[#allocation3 + $0x48] sm:$0xff] %vm35, 0.0
      %62 = vst.msk [vmem:[#allocation3 + $0x50] sm:$0xff] %vm35, 0.0
      %63 = vst.msk [vmem:[#allocation3 + $0x58] sm:$0xff] %vm35, 0.0
      %64 = vst.msk [vmem:[#allocation3 + $0x60] sm:$0xff] %vm35, 0.0
      %65 = vst.msk [vmem:[#allocation3 + $0x68] sm:$0xff] %vm35, 0.0
      %66 = vst.msk [vmem:[#allocation3 + $0x70] sm:$0xff] %vm35, 0.0
      %67 = vst.msk [vmem:[#allocation3 + $0x78] sm:$0xff] %vm35, 0.0
      %68 = vst.msk [vmem:[#allocation4] sm:$0xff] %vm35, 0.0
      %69 = vst.msk [vmem:[#allocation4 + $0x8] sm:$0xff] %vm35, 0.0
      %70 = vst.msk [vmem:[#allocation4 + $0x10] sm:$0xff] %vm35, 0.0
      %71 = vst.msk [vmem:[#allocation4 + $0x18] sm:$0xff] %vm35, 0.0
      %72 = vst.msk [vmem:[#allocation4 + $0x20] sm:$0xff] %vm35, 0.0
      %73 = vst.msk [vmem:[#allocation4 + $0x28] sm:$0xff] %vm35, 0.0
      %74 = vst.msk [vmem:[#allocation4 + $0x30] sm:$0xff] %vm35, 0.0
      %75 = vst.msk [vmem:[#allocation4 + $0x38] sm:$0xff] %vm35, 0.0
      %76 = vst.msk [vmem:[#allocation4 + $0x40] sm:$0xff] %vm35, 0.0
      %77 = vst.msk [vmem:[#allocation4 + $0x48] sm:$0xff] %vm35, 0.0
      %78 = vst.msk [vmem:[#allocation4 + $0x50] sm:$0xff] %vm35, 0.0
      %79 = vst.msk [vmem:[#allocation4 + $0x58] sm:$0xff] %vm35, 0.0
      %80 = vst.msk [vmem:[#allocation4 + $0x60] sm:$0xff] %vm35, 0.0
      %81 = vst.msk [vmem:[#allocation4 + $0x68] sm:$0xff] %vm35, 0.0
      %82 = vst.msk [vmem:[#allocation4 + $0x70] sm:$0xff] %vm35, 0.0
      %83 = vst.msk [vmem:[#allocation4 + $0x78] sm:$0xff] %vm35, 0.0
      %84 = vst.msk [vmem:[#allocation5] sm:$0xff] %vm35, 0.0
      %85 = vst.msk [vmem:[#allocation5 + $0x8] sm:$0xff] %vm35, 0.0
      %86 = vst.msk [vmem:[#allocation5 + $0x10] sm:$0xff] %vm35, 0.0
      %87 = vst.msk [vmem:[#allocation5 + $0x18] sm:$0xff] %vm35, 0.0
      %88 = vst.msk [vmem:[#allocation5 + $0x20] sm:$0xff] %vm35, 0.0
      %89 = vst.msk [vmem:[#allocation5 + $0x28] sm:$0xff] %vm35, 0.0
      %90 = vst.msk [vmem:[#allocation5 + $0x30] sm:$0xff] %vm35, 0.0
      %91 = vst.msk [vmem:[#allocation5 + $0x38] sm:$0xff] %vm35, 0.0
      %92 = vst.msk [vmem:[#allocation5 + $0x40] sm:$0xff] %vm35, 0.0
      %93 = vst.msk [vmem:[#allocation5 + $0x48] sm:$0xff] %vm35, 0.0
      %94 = vst.msk [vmem:[#allocation5 + $0x50] sm:$0xff] %vm35, 0.0
      %95 = vst.msk [vmem:[#allocation5 + $0x58] sm:$0xff] %vm35, 0.0
      %96 = vst.msk [vmem:[#allocation5 + $0x60] sm:$0xff] %vm35, 0.0
      %97 = vst.msk [vmem:[#allocation5 + $0x68] sm:$0xff] %vm35, 0.0
      %98 = vst.msk [vmem:[#allocation5 + $0x70] sm:$0xff] %vm35, 0.0
      %99 = vst.msk [vmem:[#allocation5 + $0x78] sm:$0xff] %vm35, 0.0
    $region25: #{tpu_custom_call.1} parent=1 // pred_fallthru
      _
    %v100 = vld [vmem:[%s2] sm:$0xff]
    %v101 = vld [vmem:[%s2 + $0x8] sm:$0xff]
    %v102 = vld [vmem:[%s2 + $0x10] sm:$0xff]
    %v103 = vld [vmem:[%s2 + $0x18] sm:$0xff]
    %v104 = vld [vmem:[%s2 + $0x20] sm:$0xff]
    %v105 = vld [vmem:[%s2 + $0x28] sm:$0xff]
    %v106 = vld [vmem:[%s2 + $0x30] sm:$0xff]
    %v107 = vld [vmem:[%s2 + $0x38] sm:$0xff]
    %v108 = vld [vmem:[%s2 + $0x40] sm:$0xff]
    %v109 = vld [vmem:[%s2 + $0x48] sm:$0xff]
    %v110 = vld [vmem:[%s2 + $0x50] sm:$0xff]
    %v111 = vld [vmem:[%s2 + $0x58] sm:$0xff]
    %v112 = vld [vmem:[%s2 + $0x60] sm:$0xff]
    %v113 = vld [vmem:[%s2 + $0x68] sm:$0xff]
    %v114 = vld [vmem:[%s2 + $0x70] sm:$0xff]
    %v115 = vld [vmem:[%s2 + $0x78] sm:$0xff]
    %v116 = vld [vmem:[#allocation6] sm:$0xff]
    %v117 = vld [vmem:[#allocation6 + $0x8] sm:$0xff]
    %v118 = vld [vmem:[#allocation6 + $0x10] sm:$0xff]
    %v119 = vld [vmem:[#allocation6 + $0x18] sm:$0xff]
    %v120 = vld [vmem:[#allocation6 + $0x20] sm:$0xff]
    %v121 = vld [vmem:[#allocation6 + $0x28] sm:$0xff]
    %v122 = vld [vmem:[#allocation6 + $0x30] sm:$0xff]
    %v123 = vld [vmem:[#allocation6 + $0x38] sm:$0xff]
    %v124 = vld [vmem:[#allocation6 + $0x40] sm:$0xff]
    %v125 = vld [vmem:[#allocation6 + $0x48] sm:$0xff]
    %v126 = vld [vmem:[#allocation6 + $0x50] sm:$0xff]
    %v127 = vld [vmem:[#allocation6 + $0x58] sm:$0xff]
    %v128 = vld [vmem:[#allocation6 + $0x60] sm:$0xff]
    %v129 = vld [vmem:[#allocation6 + $0x68] sm:$0xff]
    %v130 = vld [vmem:[#allocation6 + $0x70] sm:$0xff]
    %v131 = vld [vmem:[#allocation6 + $0x78] sm:$0xff]
    %132 = vmatprep.subr.mxu0 0.0
    %133 = vmatpush1.xpose.msra.mxu0 %v116
    %134 = vmatprep.subr.mxu0 0.0
    %135 = vmatpush1.xpose.msra.mxu0 %v117
    %136 = vmatprep.subr.mxu0 0.0
    %137 = vmatpush1.xpose.msra.mxu0 %v118
    %138 = vmatprep.subr.mxu0 0.0
    %139 = vmatpush1.xpose.msra.mxu0 %v119
    %140 = vmatprep.subr.mxu0 0.0
    %141 = vmatpush1.xpose.msra.mxu0 %v120
    %142 = vmatprep.subr.mxu0 0.0
    %143 = vmatpush1.xpose.msra.mxu0 %v121
    %144 = vmatprep.subr.mxu0 0.0
    %145 = vmatpush1.xpose.msra.mxu0 %v122
    %146 = vmatprep.subr.mxu0 0.0
    %147 = vmatpush1.xpose.msra.mxu0 %v123
    %148 = vmatprep.subr.mxu0 0.0
    %149 = vmatpush1.xpose.msra.mxu0 %v124
    %150 = vmatprep.subr.mxu0 0.0
    %151 = vmatpush1.xpose.msra.mxu0 %v125
    %152 = vmatprep.subr.mxu0 0.0
    %153 = vmatpush1.xpose.msra.mxu0 %v126
    %154 = vmatprep.subr.mxu0 0.0
    %155 = vmatpush1.xpose.msra.mxu0 %v127
    %156 = vmatprep.subr.mxu0 0.0
    %157 = vmatpush1.xpose.msra.mxu0 %v128
    %158 = vmatprep.subr.mxu0 0.0
    %159 = vmatpush1.xpose.msra.mxu0 %v129
    %160 = vmatprep.subr.mxu0 0.0
    %161 = vmatpush1.xpose.msra.mxu0 %v130
    %162 = vmatprep.subr.mxu0 0.0
    %163 = vmatpush1.xpose.msra.mxu0 %v131
    %164 = vmatprep.subr.mxu0 0.0
    %165 = vmatpush1.xpose.msra.mxu0 0.0
    %166 = vmatprep.subr.mxu0 0.0
    %167 = vmatpush1.xpose.msra.mxu0 0.0
    %168 = vmatprep.subr.mxu0 0.0
    %169 = vmatpush1.xpose.msra.mxu0 0.0
    %170 = vmatprep.subr.mxu0 0.0
    %171 = vmatpush1.xpose.msra.mxu0 0.0
    %172 = vmatprep.subr.mxu0 0.0
    %173 = vmatpush1.xpose.msra.mxu0 0.0
    %174 = vmatprep.subr.mxu0 0.0
    %175 = vmatpush1.xpose.msra.mxu0 0.0
    %176 = vmatprep.subr.mxu0 0.0
    %177 = vmatpush1.xpose.msra.mxu0 0.0
    %178 = vmatprep.subr.mxu0 0.0
    %179 = vmatpush1.xpose.msra.mxu0 0.0
    %180 = vmatprep.subr.mxu0 0.0
    %181 = vmatpush1.xpose.msra.mxu0 0.0
    %182 = vmatprep.subr.mxu0 0.0
    %183 = vmatpush1.xpose.msra.mxu0 0.0
    %184 = vmatprep.subr.mxu0 0.0
    %185 = vmatpush1.xpose.msra.mxu0 0.0
    %186 = vmatprep.subr.mxu0 0.0
    %187 = vmatpush1.xpose.msra.mxu0 0.0
    %188 = vmatprep.subr.mxu0 0.0
    %189 = vmatpush1.xpose.msra.mxu0 0.0
    %190 = vmatprep.subr.mxu0 0.0
    %191 = vmatpush1.xpose.msra.mxu0 0.0
    %192 = vmatprep.subr.mxu0 0.0
    %193 = vmatpush1.xpose.msra.mxu0 0.0
    %194 = vmatprep.subr.mxu0 0.0
    %195 = vmatpush1.xpose.msra.mxu0 0.0
    %196 = vmatprep.mubr.f32.mxu0 0.0
    %197 = vmatmul.mubr.f32.gmra.mrb[0].mxu0 %v100
    %v198 = vpop.f32.mrb[0].mxu0
    %v199 = vadd.f32 0.0, %v198
    %v200 = vpop.f32.mrb[0].mxu0
    %201 = vmatprep.mubr.f32.mxu0 0.0
    %202 = vmatmul.mubr.f32.gmra.mrb[0].mxu0 %v101
    %v203 = vpop.f32.mrb[0].mxu0
    %v204 = vadd.f32 0.0, %v203
    %v205 = vpop.f32.mrb[0].mxu0
    %206 = vmatprep.mubr.f32.mxu0 0.0
    %207 = vmatmul.mubr.f32.gmra.mrb[0].mxu0 %v102
    %v208 = vpop.f32.mrb[0].mxu0
    %v209 = vadd.f32 0.0, %v208
    %v210 = vpop.f32.mrb[0].mxu0
    %211 = vmatprep.mubr.f32.mxu0 0.0
    %212 = vmatmul.mubr.f32.gmra.mrb[0].mxu0 %v103
    %v213 = vpop.f32.mrb[0].mxu0
    %v214 = vadd.f32 0.0, %v213
    %v215 = vpop.f32.mrb[0].mxu0
    %216 = vmatprep.mubr.f32.mxu0 0.0
    %217 = vmatmul.mubr.f32.gmra.mrb[0].mxu0 %v104
    %v218 = vpop.f32.mrb[0].mxu0
    %v219 = vadd.f32 0.0, %v218
    %v220 = vpop.f32.mrb[0].mxu0
    %221 = vmatprep.mubr.f32.mxu0 0.0
    %222 = vmatmul.mubr.f32.gmra.mrb[0].mxu0 %v105
    %v223 = vpop.f32.mrb[0].mxu0
    %v224 = vadd.f32 0.0, %v223
    %v225 = vpop.f32.mrb[0].mxu0
    %226 = vmatprep.mubr.f32.mxu0 0.0
    %227 = vmatmul.mubr.f32.gmra.mrb[0].mxu0 %v106
    %v228 = vpop.f32.mrb[0].mxu0
    %v229 = vadd.f32 0.0, %v228
    %v230 = vpop.f32.mrb[0].mxu0
    %231 = vmatprep.mubr.f32.mxu0 0.0
    %232 = vmatmul.mubr.f32.gmra.mrb[0].mxu0 %v107
    %v233 = vpop.f32.mrb[0].mxu0
    %v234 = vadd.f32 0.0, %v233
    %v235 = vpop.f32.mrb[0].mxu0
    %236 = vmatprep.mubr.f32.mxu0 0.0
    %237 = vmatmul.mubr.f32.gmra.mrb[0].mxu0 %v108
    %v238 = vpop.f32.mrb[0].mxu0
    %v239 = vadd.f32 0.0, %v238
    %v240 = vpop.f32.mrb[0].mxu0
    %241 = vmatprep.mubr.f32.mxu0 0.0
    %242 = vmatmul.mubr.f32.gmra.mrb[0].mxu0 %v109
    %v243 = vpop.f32.mrb[0].mxu0
    %v244 = vadd.f32 0.0, %v243
    %v245 = vpop.f32.mrb[0].mxu0
    %246 = vmatprep.mubr.f32.mxu0 0.0
    %247 = vmatmul.mubr.f32.gmra.mrb[0].mxu0 %v110
    %v248 = vpop.f32.mrb[0].mxu0
    %v249 = vadd.f32 0.0, %v248
    %v250 = vpop.f32.mrb[0].mxu0
    %251 = vmatprep.mubr.f32.mxu0 0.0
    %252 = vmatmul.mubr.f32.gmra.mrb[0].mxu0 %v111
    %v253 = vpop.f32.mrb[0].mxu0
    %v254 = vadd.f32 0.0, %v253
    %v255 = vpop.f32.mrb[0].mxu0
    %256 = vmatprep.mubr.f32.mxu0 0.0
    %257 = vmatmul.mubr.f32.gmra.mrb[0].mxu0 %v112
    %v258 = vpop.f32.mrb[0].mxu0
    %v259 = vadd.f32 0.0, %v258
    %v260 = vpop.f32.mrb[0].mxu0
    %261 = vmatprep.mubr.f32.mxu0 0.0
    %262 = vmatmul.mubr.f32.gmra.mrb[0].mxu0 %v113
    %v263 = vpop.f32.mrb[0].mxu0
    %v264 = vadd.f32 0.0, %v263
    %v265 = vpop.f32.mrb[0].mxu0
    %266 = vmatprep.mubr.f32.mxu0 0.0
    %267 = vmatmul.mubr.f32.gmra.mrb[0].mxu0 %v114
    %v268 = vpop.f32.mrb[0].mxu0
    %v269 = vadd.f32 0.0, %v268
    %v270 = vpop.f32.mrb[0].mxu0
    %271 = vmatprep.mubr.f32.mxu0 0.0
    %272 = vmatmul.mubr.f32.gmra.mrb[0].mxu0 %v115
    %v273 = vpop.f32.mrb[0].mxu0
    %v274 = vadd.f32 0.0, %v273
    %v275 = vpop.f32.mrb[0].mxu0
    %276 = vdwg.mxu0
    %v277 = vmul.f32 %v199, 14.285714
    %v278 = vmul.f32 %v204, 14.285714
    %v279 = vmul.f32 %v209, 14.285714
    %v280 = vmul.f32 %v214, 14.285714
    %v281 = vmul.f32 %v219, 14.285714
    %v282 = vmul.f32 %v224, 14.285714
    %v283 = vmul.f32 %v229, 14.285714
    %v284 = vmul.f32 %v234, 14.285714
    %v285 = vmul.f32 %v239, 14.285714
    %v286 = vmul.f32 %v244, 14.285714
    %v287 = vmul.f32 %v249, 14.285714
    %v288 = vmul.f32 %v254, 14.285714
    %v289 = vmul.f32 %v259, 14.285714
    %v290 = vmul.f32 %v264, 14.285714
    %v291 = vmul.f32 %v269, 14.285714
    %v292 = vmul.f32 %v274, 14.285714
    %s293 = smul.u32 0, 128
    %s294 = smul.u32 0, 128
    %v295 = vlaneseq
    %v296 = vshrl.u32 %v295, 7
    %v297 = vadd.s32 %v296, 8
    %v298 = vadd.s32 %v296, 16
    %v299 = vadd.s32 %v296, 24
    %v300 = vadd.s32 %v296, 32
    %v301 = vadd.s32 %v296, 40
    %v302 = vadd.s32 %v296, 48
    %v303 = vadd.s32 %v296, 56
    %v304 = vadd.s32 %v296, 64
    %v305 = vadd.s32 %v296, 72
    %v306 = vadd.s32 %v296, 80
    %v307 = vadd.s32 %v296, 88
    %v308 = vadd.s32 %v296, 96
    %v309 = vadd.s32 %v296, 104
    %v310 = vadd.s32 %v296, 112
    %v311 = vadd.s32 %v296, 120
    %v312 = vstv %s293
    %v313 = vadd.s32 %v312, %v296
    %v314 = vadd.s32 %v312, %v297
    %v315 = vadd.s32 %v312, %v298
    %v316 = vadd.s32 %v312, %v299
    %v317 = vadd.s32 %v312, %v300
    %v318 = vadd.s32 %v312, %v301
    %v319 = vadd.s32 %v312, %v302
    %v320 = vadd.s32 %v312, %v303
    %v321 = vadd.s32 %v312, %v304
    %v322 = vadd.s32 %v312, %v305
    %v323 = vadd.s32 %v312, %v306
    %v324 = vadd.s32 %v312, %v307
    %v325 = vadd.s32 %v312, %v308
    %v326 = vadd.s32 %v312, %v309
    %v327 = vadd.s32 %v312, %v310
    %v328 = vadd.s32 %v312, %v311
    %v329 = vlaneseq
    %v330 = vand.u32 %v329, 127
    %v331 = vstv %s294
    %v332 = vadd.s32 %v331, %v330
    %vm333 = vcmp.lt.s32.totalorder %v332, 16
    %vm334 = vcmp.ne.s32.totalorder %v313, %v332
    %vm335 = vcmp.ne.s32.totalorder %v314, %v332
    %vm336 = vcmp.ne.s32.totalorder %v315, %v332
    %vm337 = vcmp.ne.s32.totalorder %v316, %v332
    %vm338 = vcmp.ne.s32.totalorder %v317, %v332
    %vm339 = vcmp.ne.s32.totalorder %v318, %v332
    %vm340 = vcmp.ne.s32.totalorder %v319, %v332
    %vm341 = vcmp.ne.s32.totalorder %v320, %v332
    %vm342 = vcmp.ne.s32.totalorder %v321, %v332
    %vm343 = vcmp.ne.s32.totalorder %v322, %v332
    %vm344 = vcmp.ne.s32.totalorder %v323, %v332
    %vm345 = vcmp.ne.s32.totalorder %v324, %v332
    %vm346 = vcmp.ne.s32.totalorder %v325, %v332
    %vm347 = vcmp.ne.s32.totalorder %v326, %v332
    %vm348 = vcmp.ne.s32.totalorder %v327, %v332
    %vm349 = vcmp.ne.s32.totalorder %v328, %v332
    %vm350 = vmand %vm333, %vm334
    %vm351 = vmand %vm333, %vm335
    %vm352 = vmand %vm333, %vm336
    %vm353 = vmand %vm333, %vm337
    %vm354 = vmand %vm333, %vm338
    %vm355 = vmand %vm333, %vm339
    %vm356 = vmand %vm333, %vm340
    %vm357 = vmand %vm333, %vm341
    %vm358 = vmand %vm333, %vm342
    %vm359 = vmand %vm333, %vm343
    %vm360 = vmand %vm333, %vm344
    %vm361 = vmand %vm333, %vm345
    %vm362 = vmand %vm333, %vm346
    %vm363 = vmand %vm333, %vm347
    %vm364 = vmand %vm333, %vm348
    %vm365 = vmand %vm333, %vm349
    %v366 = vsel %vm350, 1, 0
    %v367 = vsel %vm351, 1, 0
    %v368 = vsel %vm352, 1, 0
    %v369 = vsel %vm353, 1, 0
    %v370 = vsel %vm354, 1, 0
    %v371 = vsel %vm355, 1, 0
    %v372 = vsel %vm356, 1, 0
    %v373 = vsel %vm357, 1, 0
    %v374 = vsel %vm358, 1, 0
    %v375 = vsel %vm359, 1, 0
    %v376 = vsel %vm360, 1, 0
    %v377 = vsel %vm361, 1, 0
    %v378 = vsel %vm362, 1, 0
    %v379 = vsel %vm363, 1, 0
    %v380 = vsel %vm364, 1, 0
    %v381 = vsel %vm365, 1, 0
    %v382 = vcvt.s32.f32 %v366
    %v383 = vcvt.s32.f32 %v367
    %v384 = vcvt.s32.f32 %v368
    %v385 = vcvt.s32.f32 %v369
    %v386 = vcvt.s32.f32 %v370
    %v387 = vcvt.s32.f32 %v371
    %v388 = vcvt.s32.f32 %v372
    %v389 = vcvt.s32.f32 %v373
    %v390 = vcvt.s32.f32 %v374
    %v391 = vcvt.s32.f32 %v375
    %v392 = vcvt.s32.f32 %v376
    %v393 = vcvt.s32.f32 %v377
    %v394 = vcvt.s32.f32 %v378
    %v395 = vcvt.s32.f32 %v379
    %v396 = vcvt.s32.f32 %v380
    %v397 = vcvt.s32.f32 %v381
    %v398 = vld [vmem:[%s0] sm:$0xff]
    %v399 = vld [vmem:[%s0 + $0x8] sm:$0xff]
    %v400 = vld [vmem:[%s0 + $0x10] sm:$0xff]
    %v401 = vld [vmem:[%s0 + $0x18] sm:$0xff]
    %v402 = vld [vmem:[%s0 + $0x20] sm:$0xff]
    %v403 = vld [vmem:[%s0 + $0x28] sm:$0xff]
    %v404 = vld [vmem:[%s0 + $0x30] sm:$0xff]
    %v405 = vld [vmem:[%s0 + $0x38] sm:$0xff]
    %v406 = vld [vmem:[%s0 + $0x40] sm:$0xff]
    %v407 = vld [vmem:[%s0 + $0x48] sm:$0xff]
    %v408 = vld [vmem:[%s0 + $0x50] sm:$0xff]
    %v409 = vld [vmem:[%s0 + $0x58] sm:$0xff]
    %v410 = vld [vmem:[%s0 + $0x60] sm:$0xff]
    %v411 = vld [vmem:[%s0 + $0x68] sm:$0xff]
    %v412 = vld [vmem:[%s0 + $0x70] sm:$0xff]
    %v413 = vld [vmem:[%s0 + $0x78] sm:$0xff]
    %v414 = vld [vmem:[%s1] sm:$0x1]
    %415 = vset.pattern.permute.xlu0 0
    %416 = vperm.xlu0 %415, %v398
    %v417 = vpop.permute.xlu0 %416
    %418 = vset.pattern.permute.xlu0 0
    %419 = vperm.xlu0 %418, %v399
    %v420 = vpop.permute.xlu0 %419
    %421 = vset.pattern.permute.xlu0 0
    %422 = vperm.xlu0 %421, %v400
    %v423 = vpop.permute.xlu0 %422
    %424 = vset.pattern.permute.xlu0 0
    %425 = vperm.xlu0 %424, %v401
    %v426 = vpop.permute.xlu0 %425
    %427 = vset.pattern.permute.xlu0 0
    %428 = vperm.xlu0 %427, %v402
    %v429 = vpop.permute.xlu0 %428
    %430 = vset.pattern.permute.xlu0 0
    %431 = vperm.xlu0 %430, %v403
    %v432 = vpop.permute.xlu0 %431
    %433 = vset.pattern.permute.xlu0 0
    %434 = vperm.xlu0 %433, %v404
    %v435 = vpop.permute.xlu0 %434
    %436 = vset.pattern.permute.xlu0 0
    %437 = vperm.xlu0 %436, %v405
    %v438 = vpop.permute.xlu0 %437
    %439 = vset.pattern.permute.xlu0 0
    %440 = vperm.xlu0 %439, %v406
    %v441 = vpop.permute.xlu0 %440
    %442 = vset.pattern.permute.xlu0 0
    %443 = vperm.xlu0 %442, %v407
    %v444 = vpop.permute.xlu0 %443
    %445 = vset.pattern.permute.xlu0 0
    %446 = vperm.xlu0 %445, %v408
    %v447 = vpop.permute.xlu0 %446
    %448 = vset.pattern.permute.xlu0 0
    %449 = vperm.xlu0 %448, %v409
    %v450 = vpop.permute.xlu0 %449
    %451 = vset.pattern.permute.xlu0 0
    %452 = vperm.xlu0 %451, %v410
    %v453 = vpop.permute.xlu0 %452
    %454 = vset.pattern.permute.xlu0 0
    %455 = vperm.xlu0 %454, %v411
    %v456 = vpop.permute.xlu0 %455
    %457 = vset.pattern.permute.xlu0 0
    %458 = vperm.xlu0 %457, %v412
    %v459 = vpop.permute.xlu0 %458
    %460 = vset.pattern.permute.xlu0 0
    %461 = vperm.xlu0 %460, %v413
    %v462 = vpop.permute.xlu0 %461
    %v463 = vlaneseq
    %v464 = vshrl.u32 %v463, 7
    %v465 = vsub.s32 0, %v464
    %v466 = vrot.slane %v414, %v465
    %vm467 = vcmp.eq.s32.totalorder %v417, %v466
    %vm468 = vcmp.eq.s32.totalorder %v420, %v466
    %vm469 = vcmp.eq.s32.totalorder %v423, %v466
    %vm470 = vcmp.eq.s32.totalorder %v426, %v466
    %vm471 = vcmp.eq.s32.totalorder %v429, %v466
    %vm472 = vcmp.eq.s32.totalorder %v432, %v466
    %vm473 = vcmp.eq.s32.totalorder %v435, %v466
    %vm474 = vcmp.eq.s32.totalorder %v438, %v466
    %vm475 = vcmp.eq.s32.totalorder %v441, %v466
    %vm476 = vcmp.eq.s32.totalorder %v444, %v466
    %vm477 = vcmp.eq.s32.totalorder %v447, %v466
    %vm478 = vcmp.eq.s32.totalorder %v450, %v466
    %vm479 = vcmp.eq.s32.totalorder %v453, %v466
    %vm480 = vcmp.eq.s32.totalorder %v456, %v466
    %vm481 = vcmp.eq.s32.totalorder %v459, %v466
    %vm482 = vcmp.eq.s32.totalorder %v462, %v466
    %v483 = vsel %vm467, 1, 0
    %v484 = vsel %vm468, 1, 0
    %v485 = vsel %vm469, 1, 0
    %v486 = vsel %vm470, 1, 0
    %v487 = vsel %vm471, 1, 0
    %v488 = vsel %vm472, 1, 0
    %v489 = vsel %vm473, 1, 0
    %v490 = vsel %vm474, 1, 0
    %v491 = vsel %vm475, 1, 0
    %v492 = vsel %vm476, 1, 0
    %v493 = vsel %vm477, 1, 0
    %v494 = vsel %vm478, 1, 0
    %v495 = vsel %vm479, 1, 0
    %v496 = vsel %vm480, 1, 0
    %v497 = vsel %vm481, 1, 0
    %v498 = vsel %vm482, 1, 0
    %v499 = vcvt.s32.f32 %v483
    %v500 = vcvt.s32.f32 %v484
    %v501 = vcvt.s32.f32 %v485
    %v502 = vcvt.s32.f32 %v486
    %v503 = vcvt.s32.f32 %v487
    %v504 = vcvt.s32.f32 %v488
    %v505 = vcvt.s32.f32 %v489
    %v506 = vcvt.s32.f32 %v490
    %v507 = vcvt.s32.f32 %v491
    %v508 = vcvt.s32.f32 %v492
    %v509 = vcvt.s32.f32 %v493
    %v510 = vcvt.s32.f32 %v494
    %v511 = vcvt.s32.f32 %v495
    %v512 = vcvt.s32.f32 %v496
    %v513 = vcvt.s32.f32 %v497
    %v514 = vcvt.s32.f32 %v498
    %v515 = vmul.f32 %v499, %v382
    %v516 = vmul.f32 %v500, %v383
    %v517 = vmul.f32 %v501, %v384
    %v518 = vmul.f32 %v502, %v385
    %v519 = vmul.f32 %v503, %v386
    %v520 = vmul.f32 %v504, %v387
    %v521 = vmul.f32 %v505, %v388
    %v522 = vmul.f32 %v506, %v389
    %v523 = vmul.f32 %v507, %v390
    %v524 = vmul.f32 %v508, %v391
    %v525 = vmul.f32 %v509, %v392
    %v526 = vmul.f32 %v510, %v393
    %v527 = vmul.f32 %v511, %v394
    %v528 = vmul.f32 %v512, %v395
    %v529 = vmul.f32 %v513, %v396
    %v530 = vmul.f32 %v514, %v397
    %v531 = vsel %vm350, %v277, -1e+30
    %v532 = vsel %vm351, %v278, -1e+30
    %v533 = vsel %vm352, %v279, -1e+30
    %v534 = vsel %vm353, %v280, -1e+30
    %v535 = vsel %vm354, %v281, -1e+30
    %v536 = vsel %vm355, %v282, -1e+30
    %v537 = vsel %vm356, %v283, -1e+30
    %v538 = vsel %vm357, %v284, -1e+30
    %v539 = vsel %vm358, %v285, -1e+30
    %v540 = vsel %vm359, %v286, -1e+30
    %v541 = vsel %vm360, %v287, -1e+30
    %v542 = vsel %vm361, %v288, -1e+30
    %v543 = vsel %vm362, %v289, -1e+30
    %v544 = vsel %vm363, %v290, -1e+30
    %v545 = vsel %vm364, %v291, -1e+30
    %v546 = vsel %vm365, %v292, -1e+30
    %547 = vmax.xlane.f32.xlu0 %v531
    %v548 = vpop.xlane.xlu0 %547
    %549 = vmax.xlane.f32.xlu0 %v532
    %v550 = vpop.xlane.xlu0 %549
    %551 = vmax.xlane.f32.xlu0 %v533
    %v552 = vpop.xlane.xlu0 %551
    %553 = vmax.xlane.f32.xlu0 %v534
    %v554 = vpop.xlane.xlu0 %553
    %555 = vmax.xlane.f32.xlu0 %v535
    %v556 = vpop.xlane.xlu0 %555
    %557 = vmax.xlane.f32.xlu0 %v536
    %v558 = vpop.xlane.xlu0 %557
    %559 = vmax.xlane.f32.xlu0 %v537
    %v560 = vpop.xlane.xlu0 %559
    %561 = vmax.xlane.f32.xlu0 %v538
    %v562 = vpop.xlane.xlu0 %561
    %563 = vmax.xlane.f32.xlu0 %v539
    %v564 = vpop.xlane.xlu0 %563
    %565 = vmax.xlane.f32.xlu0 %v540
    %v566 = vpop.xlane.xlu0 %565
    %567 = vmax.xlane.f32.xlu0 %v541
    %v568 = vpop.xlane.xlu0 %567
    %569 = vmax.xlane.f32.xlu0 %v542
    %v570 = vpop.xlane.xlu0 %569
    %571 = vmax.xlane.f32.xlu0 %v543
    %v572 = vpop.xlane.xlu0 %571
    %573 = vmax.xlane.f32.xlu0 %v544
    %v574 = vpop.xlane.xlu0 %573
    %575 = vmax.xlane.f32.xlu0 %v545
    %v576 = vpop.xlane.xlu0 %575
    %577 = vmax.xlane.f32.xlu0 %v546
    %v578 = vpop.xlane.xlu0 %577
    %v579 = vld [vmem:[#allocation2] sm:$0xff]
    %v580 = vld [vmem:[#allocation2 + $0x8] sm:$0xff]
    %v581 = vld [vmem:[#allocation2 + $0x10] sm:$0xff]
    %v582 = vld [vmem:[#allocation2 + $0x18] sm:$0xff]
    %v583 = vld [vmem:[#allocation2 + $0x20] sm:$0xff]
    %v584 = vld [vmem:[#allocation2 + $0x28] sm:$0xff]
    %v585 = vld [vmem:[#allocation2 + $0x30] sm:$0xff]
    %v586 = vld [vmem:[#allocation2 + $0x38] sm:$0xff]
    %v587 = vld [vmem:[#allocation2 + $0x40] sm:$0xff]
    %v588 = vld [vmem:[#allocation2 + $0x48] sm:$0xff]
    %v589 = vld [vmem:[#allocation2 + $0x50] sm:$0xff]
    %v590 = vld [vmem:[#allocation2 + $0x58] sm:$0xff]
    %v591 = vld [vmem:[#allocation2 + $0x60] sm:$0xff]
    %v592 = vld [vmem:[#allocation2 + $0x68] sm:$0xff]
    %v593 = vld [vmem:[#allocation2 + $0x70] sm:$0xff]
    %v594 = vld [vmem:[#allocation2 + $0x78] sm:$0xff]
    %v595 = vmax.f32 %v579, %v548
    %v596 = vmax.f32 %v580, %v550
    %v597 = vmax.f32 %v581, %v552
    %v598 = vmax.f32 %v582, %v554
    %v599 = vmax.f32 %v583, %v556
    %v600 = vmax.f32 %v584, %v558
    %v601 = vmax.f32 %v585, %v560
    %v602 = vmax.f32 %v586, %v562
    %v603 = vmax.f32 %v587, %v564
    %v604 = vmax.f32 %v588, %v566
    %v605 = vmax.f32 %v589, %v568
    %v606 = vmax.f32 %v590, %v570
    %v607 = vmax.f32 %v591, %v572
    %v608 = vmax.f32 %v592, %v574
    %v609 = vmax.f32 %v593, %v576
    %v610 = vmax.f32 %v594, %v578
    %v611 = vsub.f32 %v579, %v595
    %v612 = vsub.f32 %v580, %v596
    %v613 = vsub.f32 %v581, %v597
    %v614 = vsub.f32 %v582, %v598
    %v615 = vsub.f32 %v583, %v599
    %v616 = vsub.f32 %v584, %v600
    %v617 = vsub.f32 %v585, %v601
    %v618 = vsub.f32 %v586, %v602
    %v619 = vsub.f32 %v587, %v603
    %v620 = vsub.f32 %v588, %v604
    %v621 = vsub.f32 %v589, %v605
    %v622 = vsub.f32 %v590, %v606
    %v623 = vsub.f32 %v591, %v607
    %v624 = vsub.f32 %v592, %v608
    %v625 = vsub.f32 %v593, %v609
    %v626 = vsub.f32 %v594, %v610
    %v627 = vmul.f32 %v611, 1.442695
    %v628 = vpow.pop %v627
    %v629 = vmul.f32 %v612, 1.442695
    %v630 = vpow.pop %v629
    %v631 = vmul.f32 %v613, 1.442695
    %v632 = vpow.pop %v631
    %v633 = vmul.f32 %v614, 1.442695
    %v634 = vpow.pop %v633
    %v635 = vmul.f32 %v615, 1.442695
    %v636 = vpow.pop %v635
    %v637 = vmul.f32 %v616, 1.442695
    %v638 = vpow.pop %v637
    %v639 = vmul.f32 %v617, 1.442695
    %v640 = vpow.pop %v639
    %v641 = vmul.f32 %v618, 1.442695
    %v642 = vpow.pop %v641
    %v643 = vmul.f32 %v619, 1.442695
    %v644 = vpow.pop %v643
    %v645 = vmul.f32 %v620, 1.442695
    %v646 = vpow.pop %v645
    %v647 = vmul.f32 %v621, 1.442695
    %v648 = vpow.pop %v647
    %v649 = vmul.f32 %v622, 1.442695
    %v650 = vpow.pop %v649
    %v651 = vmul.f32 %v623, 1.442695
    %v652 = vpow.pop %v651
    %v653 = vmul.f32 %v624, 1.442695
    %v654 = vpow.pop %v653
    %v655 = vmul.f32 %v625, 1.442695
    %v656 = vpow.pop %v655
    %v657 = vmul.f32 %v626, 1.442695
    %v658 = vpow.pop %v657
    %660 = vset.pattern.permute.xlu0 0
    %661 = vperm.xlu0 %660, %v595
    %v662 = vpop.permute.xlu0 %661
    %665 = vset.pattern.permute.xlu0 0
    %666 = vperm.xlu0 %665, %v596
    %v667 = vpop.permute.xlu0 %666
    %670 = vset.pattern.permute.xlu0 0
    %671 = vperm.xlu0 %670, %v597
    %v672 = vpop.permute.xlu0 %671
    %675 = vset.pattern.permute.xlu0 0
    %676 = vperm.xlu0 %675, %v598
    %v677 = vpop.permute.xlu0 %676
    %680 = vset.pattern.permute.xlu0 0
    %681 = vperm.xlu0 %680, %v599
    %v682 = vpop.permute.xlu0 %681
    %685 = vset.pattern.permute.xlu0 0
    %686 = vperm.xlu0 %685, %v600
    %v687 = vpop.permute.xlu0 %686
    %690 = vset.pattern.permute.xlu0 0
    %691 = vperm.xlu0 %690, %v601
    %v692 = vpop.permute.xlu0 %691
    %695 = vset.pattern.permute.xlu0 0
    %696 = vperm.xlu0 %695, %v602
    %v697 = vpop.permute.xlu0 %696
    %700 = vset.pattern.permute.xlu0 0
    %701 = vperm.xlu0 %700, %v603
    %v702 = vpop.permute.xlu0 %701
    %705 = vset.pattern.permute.xlu0 0
    %706 = vperm.xlu0 %705, %v604
    %v707 = vpop.permute.xlu0 %706
    %710 = vset.pattern.permute.xlu0 0
    %711 = vperm.xlu0 %710, %v605
    %v712 = vpop.permute.xlu0 %711
    %715 = vset.pattern.permute.xlu0 0
    %716 = vperm.xlu0 %715, %v606
    %v717 = vpop.permute.xlu0 %716
    %720 = vset.pattern.permute.xlu0 0
    %721 = vperm.xlu0 %720, %v607
    %v722 = vpop.permute.xlu0 %721
    %725 = vset.pattern.permute.xlu0 0
    %726 = vperm.xlu0 %725, %v608
    %v727 = vpop.permute.xlu0 %726
    %730 = vset.pattern.permute.xlu0 0
    %731 = vperm.xlu0 %730, %v609
    %v732 = vpop.permute.xlu0 %731
    %735 = vset.pattern.permute.xlu0 0
    %736 = vperm.xlu0 %735, %v610
    %v737 = vpop.permute.xlu0 %736
    %v739 = vsub.f32 %v531, %v662
    %v740 = vsub.f32 %v532, %v667
    %v741 = vsub.f32 %v533, %v672
    %v742 = vsub.f32 %v534, %v677
    %v743 = vsub.f32 %v535, %v682
    %v744 = vsub.f32 %v536, %v687
    %v745 = vsub.f32 %v537, %v692
    %v746 = vsub.f32 %v538, %v697
    %v747 = vsub.f32 %v539, %v702
    %v748 = vsub.f32 %v540, %v707
    %v749 = vsub.f32 %v541, %v712
    %v750 = vsub.f32 %v542, %v717
    %v751 = vsub.f32 %v543, %v722
    %v752 = vsub.f32 %v544, %v727
    %v753 = vsub.f32 %v545, %v732
    %v754 = vsub.f32 %v546, %v737
    %v755 = vmul.f32 %v739, 1.442695
    %v756 = vpow.pop %v755
    %v757 = vmul.f32 %v740, 1.442695
    %v758 = vpow.pop %v757
    %v759 = vmul.f32 %v741, 1.442695
    %v760 = vpow.pop %v759
    %v761 = vmul.f32 %v742, 1.442695
    %v762 = vpow.pop %v761
    %v763 = vmul.f32 %v743, 1.442695
    %v764 = vpow.pop %v763
    %v765 = vmul.f32 %v744, 1.442695
    %v766 = vpow.pop %v765
    %v767 = vmul.f32 %v745, 1.442695
    %v768 = vpow.pop %v767
    %v769 = vmul.f32 %v746, 1.442695
    %v770 = vpow.pop %v769
    %v771 = vmul.f32 %v747, 1.442695
    %v772 = vpow.pop %v771
    %v773 = vmul.f32 %v748, 1.442695
    %v774 = vpow.pop %v773
    %v775 = vmul.f32 %v749, 1.442695
    %v776 = vpow.pop %v775
    %v777 = vmul.f32 %v750, 1.442695
    %v778 = vpow.pop %v777
    %v779 = vmul.f32 %v751, 1.442695
    %v780 = vpow.pop %v779
    %v781 = vmul.f32 %v752, 1.442695
    %v782 = vpow.pop %v781
    %v783 = vmul.f32 %v753, 1.442695
    %v784 = vpow.pop %v783
    %v785 = vmul.f32 %v754, 1.442695
    %v786 = vpow.pop %v785
    %v787 = vmul.f32 %v756, %v382
    %v788 = vmul.f32 %v758, %v383
    %v789 = vmul.f32 %v760, %v384
    %v790 = vmul.f32 %v762, %v385
    %v791 = vmul.f32 %v764, %v386
    %v792 = vmul.f32 %v766, %v387
    %v793 = vmul.f32 %v768, %v388
    %v794 = vmul.f32 %v770, %v389
    %v795 = vmul.f32 %v772, %v390
    %v796 = vmul.f32 %v774, %v391
    %v797 = vmul.f32 %v776, %v392
    %v798 = vmul.f32 %v778, %v393
    %v799 = vmul.f32 %v780, %v394
    %v800 = vmul.f32 %v782, %v395
    %v801 = vmul.f32 %v784, %v396
    %v802 = vmul.f32 %v786, %v397
    %v803 = vld [vmem:[#allocation3] sm:$0xff]
    %v804 = vld [vmem:[#allocation3 + $0x8] sm:$0xff]
    %v805 = vld [vmem:[#allocation3 + $0x10] sm:$0xff]
    %v806 = vld [vmem:[#allocation3 + $0x18] sm:$0xff]
    %v807 = vld [vmem:[#allocation3 + $0x20] sm:$0xff]
    %v808 = vld [vmem:[#allocation3 + $0x28] sm:$0xff]
    %v809 = vld [vmem:[#allocation3 + $0x30] sm:$0xff]
    %v810 = vld [vmem:[#allocation3 + $0x38] sm:$0xff]
    %v811 = vld [vmem:[#allocation3 + $0x40] sm:$0xff]
    %v812 = vld [vmem:[#allocation3 + $0x48] sm:$0xff]
    %v813 = vld [vmem:[#allocation3 + $0x50] sm:$0xff]
    %v814 = vld [vmem:[#allocation3 + $0x58] sm:$0xff]
    %v815 = vld [vmem:[#allocation3 + $0x60] sm:$0xff]
    %v816 = vld [vmem:[#allocation3 + $0x68] sm:$0xff]
    %v817 = vld [vmem:[#allocation3 + $0x70] sm:$0xff]
    %v818 = vld [vmem:[#allocation3 + $0x78] sm:$0xff]
    %v819 = vmul.f32 %v628, %v803
    %v820 = vmul.f32 %v630, %v804
    %v821 = vmul.f32 %v632, %v805
    %v822 = vmul.f32 %v634, %v806
    %v823 = vmul.f32 %v636, %v807
    %v824 = vmul.f32 %v638, %v808
    %v825 = vmul.f32 %v640, %v809
    %v826 = vmul.f32 %v642, %v810
    %v827 = vmul.f32 %v644, %v811
    %v828 = vmul.f32 %v646, %v812
    %v829 = vmul.f32 %v648, %v813
    %v830 = vmul.f32 %v650, %v814
    %v831 = vmul.f32 %v652, %v815
    %v832 = vmul.f32 %v654, %v816
    %v833 = vmul.f32 %v656, %v817
    %v834 = vmul.f32 %v658, %v818
    %835 = vadd.xlane.f32.xlu0 %v787
    %v836 = vpop.xlane.xlu0 %835
    %837 = vadd.xlane.f32.xlu0 %v788
    %v838 = vpop.xlane.xlu0 %837
    %839 = vadd.xlane.f32.xlu0 %v789
    %v840 = vpop.xlane.xlu0 %839
    %841 = vadd.xlane.f32.xlu0 %v790
    %v842 = vpop.xlane.xlu0 %841
    %843 = vadd.xlane.f32.xlu0 %v791
    %v844 = vpop.xlane.xlu0 %843
    %845 = vadd.xlane.f32.xlu0 %v792
    %v846 = vpop.xlane.xlu0 %845
    %847 = vadd.xlane.f32.xlu0 %v793
    %v848 = vpop.xlane.xlu0 %847
    %849 = vadd.xlane.f32.xlu0 %v794
    %v850 = vpop.xlane.xlu0 %849
    %851 = vadd.xlane.f32.xlu0 %v795
    %v852 = vpop.xlane.xlu0 %851
    %853 = vadd.xlane.f32.xlu0 %v796
    %v854 = vpop.xlane.xlu0 %853
    %855 = vadd.xlane.f32.xlu0 %v797
    %v856 = vpop.xlane.xlu0 %855
    %857 = vadd.xlane.f32.xlu0 %v798
    %v858 = vpop.xlane.xlu0 %857
    %859 = vadd.xlane.f32.xlu0 %v799
    %v860 = vpop.xlane.xlu0 %859
    %861 = vadd.xlane.f32.xlu0 %v800
    %v862 = vpop.xlane.xlu0 %861
    %863 = vadd.xlane.f32.xlu0 %v801
    %v864 = vpop.xlane.xlu0 %863
    %865 = vadd.xlane.f32.xlu0 %v802
    %v866 = vpop.xlane.xlu0 %865
    %v867 = vadd.f32 %v819, %v836
    %v868 = vadd.f32 %v820, %v838
    %v869 = vadd.f32 %v821, %v840
    %v870 = vadd.f32 %v822, %v842
    %v871 = vadd.f32 %v823, %v844
    %v872 = vadd.f32 %v824, %v846
    %v873 = vadd.f32 %v825, %v848
    %v874 = vadd.f32 %v826, %v850
    %v875 = vadd.f32 %v827, %v852
    %v876 = vadd.f32 %v828, %v854
    %v877 = vadd.f32 %v829, %v856
    %v878 = vadd.f32 %v830, %v858
    %v879 = vadd.f32 %v831, %v860
    %v880 = vadd.f32 %v832, %v862
    %v881 = vadd.f32 %v833, %v864
    %v882 = vadd.f32 %v834, %v866
    %vm883 = vcmask 7168
    %884 = vst.msk [vmem:[#allocation3] sm:$0xff] %vm883, %v867
    %885 = vst.msk [vmem:[#allocation3 + $0x8] sm:$0xff] %vm883, %v868
    %886 = vst.msk [vmem:[#allocation3 + $0x10] sm:$0xff] %vm883, %v869
    %887 = vst.msk [vmem:[#allocation3 + $0x18] sm:$0xff] %vm883, %v870
    %888 = vst.msk [vmem:[#allocation3 + $0x20] sm:$0xff] %vm883, %v871
    %889 = vst.msk [vmem:[#allocation3 + $0x28] sm:$0xff] %vm883, %v872
    %890 = vst.msk [vmem:[#allocation3 + $0x30] sm:$0xff] %vm883, %v873
    %891 = vst.msk [vmem:[#allocation3 + $0x38] sm:$0xff] %vm883, %v874
    %892 = vst.msk [vmem:[#allocation3 + $0x40] sm:$0xff] %vm883, %v875
    %893 = vst.msk [vmem:[#allocation3 + $0x48] sm:$0xff] %vm883, %v876
    %894 = vst.msk [vmem:[#allocation3 + $0x50] sm:$0xff] %vm883, %v877
    %895 = vst.msk [vmem:[#allocation3 + $0x58] sm:$0xff] %vm883, %v878
    %896 = vst.msk [vmem:[#allocation3 + $0x60] sm:$0xff] %vm883, %v879
    %897 = vst.msk [vmem:[#allocation3 + $0x68] sm:$0xff] %vm883, %v880
    %898 = vst.msk [vmem:[#allocation3 + $0x70] sm:$0xff] %vm883, %v881
    %899 = vst.msk [vmem:[#allocation3 + $0x78] sm:$0xff] %vm883, %v882
    %900 = vst.msk [vmem:[#allocation2] sm:$0xff] %vm883, %v595
    %901 = vst.msk [vmem:[#allocation2 + $0x8] sm:$0xff] %vm883, %v596
    %902 = vst.msk [vmem:[#allocation2 + $0x10] sm:$0xff] %vm883, %v597
    %903 = vst.msk [vmem:[#allocation2 + $0x18] sm:$0xff] %vm883, %v598
    %904 = vst.msk [vmem:[#allocation2 + $0x20] sm:$0xff] %vm883, %v599
    %905 = vst.msk [vmem:[#allocation2 + $0x28] sm:$0xff] %vm883, %v600
    %906 = vst.msk [vmem:[#allocation2 + $0x30] sm:$0xff] %vm883, %v601
    %907 = vst.msk [vmem:[#allocation2 + $0x38] sm:$0xff] %vm883, %v602
    %908 = vst.msk [vmem:[#allocation2 + $0x40] sm:$0xff] %vm883, %v603
    %909 = vst.msk [vmem:[#allocation2 + $0x48] sm:$0xff] %vm883, %v604
    %910 = vst.msk [vmem:[#allocation2 + $0x50] sm:$0xff] %vm883, %v605
    %911 = vst.msk [vmem:[#allocation2 + $0x58] sm:$0xff] %vm883, %v606
    %912 = vst.msk [vmem:[#allocation2 + $0x60] sm:$0xff] %vm883, %v607
    %913 = vst.msk [vmem:[#allocation2 + $0x68] sm:$0xff] %vm883, %v608
    %914 = vst.msk [vmem:[#allocation2 + $0x70] sm:$0xff] %vm883, %v609
    %915 = vst.msk [vmem:[#allocation2 + $0x78] sm:$0xff] %vm883, %v610
    %v916 = vld [vmem:[#allocation4] sm:$0xff]
    %v917 = vld [vmem:[#allocation4 + $0x8] sm:$0xff]
    %v918 = vld [vmem:[#allocation4 + $0x10] sm:$0xff]
    %v919 = vld [vmem:[#allocation4 + $0x18] sm:$0xff]
    %v920 = vld [vmem:[#allocation4 + $0x20] sm:$0xff]
    %v921 = vld [vmem:[#allocation4 + $0x28] sm:$0xff]
    %v922 = vld [vmem:[#allocation4 + $0x30] sm:$0xff]
    %v923 = vld [vmem:[#allocation4 + $0x38] sm:$0xff]
    %v924 = vld [vmem:[#allocation4 + $0x40] sm:$0xff]
    %v925 = vld [vmem:[#allocation4 + $0x48] sm:$0xff]
    %v926 = vld [vmem:[#allocation4 + $0x50] sm:$0xff]
    %v927 = vld [vmem:[#allocation4 + $0x58] sm:$0xff]
    %v928 = vld [vmem:[#allocation4 + $0x60] sm:$0xff]
    %v929 = vld [vmem:[#allocation4 + $0x68] sm:$0xff]
    %v930 = vld [vmem:[#allocation4 + $0x70] sm:$0xff]
    %v931 = vld [vmem:[#allocation4 + $0x78] sm:$0xff]
    %v932 = vmul.f32 %v515, %v277
    %v933 = vmul.f32 %v516, %v278
    %v934 = vmul.f32 %v517, %v279
    %v935 = vmul.f32 %v518, %v280
    %v936 = vmul.f32 %v519, %v281
    %v937 = vmul.f32 %v520, %v282
    %v938 = vmul.f32 %v521, %v283
    %v939 = vmul.f32 %v522, %v284
    %v940 = vmul.f32 %v523, %v285
    %v941 = vmul.f32 %v524, %v286
    %v942 = vmul.f32 %v525, %v287
    %v943 = vmul.f32 %v526, %v288
    %v944 = vmul.f32 %v527, %v289
    %v945 = vmul.f32 %v528, %v290
    %v946 = vmul.f32 %v529, %v291
    %v947 = vmul.f32 %v530, %v292
    %948 = vadd.xlane.f32.xlu0 %v932
    %v949 = vpop.xlane.xlu0 %948
    %950 = vadd.xlane.f32.xlu0 %v933
    %v951 = vpop.xlane.xlu0 %950
    %952 = vadd.xlane.f32.xlu0 %v934
    %v953 = vpop.xlane.xlu0 %952
    %954 = vadd.xlane.f32.xlu0 %v935
    %v955 = vpop.xlane.xlu0 %954
    %956 = vadd.xlane.f32.xlu0 %v936
    %v957 = vpop.xlane.xlu0 %956
    %958 = vadd.xlane.f32.xlu0 %v937
    %v959 = vpop.xlane.xlu0 %958
    %960 = vadd.xlane.f32.xlu0 %v938
    %v961 = vpop.xlane.xlu0 %960
    %962 = vadd.xlane.f32.xlu0 %v939
    %v963 = vpop.xlane.xlu0 %962
    %964 = vadd.xlane.f32.xlu0 %v940
    %v965 = vpop.xlane.xlu0 %964
    %966 = vadd.xlane.f32.xlu0 %v941
    %v967 = vpop.xlane.xlu0 %966
    %968 = vadd.xlane.f32.xlu0 %v942
    %v969 = vpop.xlane.xlu0 %968
    %970 = vadd.xlane.f32.xlu0 %v943
    %v971 = vpop.xlane.xlu0 %970
    %972 = vadd.xlane.f32.xlu0 %v944
    %v973 = vpop.xlane.xlu0 %972
    %974 = vadd.xlane.f32.xlu0 %v945
    %v975 = vpop.xlane.xlu0 %974
    %976 = vadd.xlane.f32.xlu0 %v946
    %v977 = vpop.xlane.xlu0 %976
    %978 = vadd.xlane.f32.xlu0 %v947
    %v979 = vpop.xlane.xlu0 %978
    %v980 = vadd.f32 %v916, %v949
    %v981 = vadd.f32 %v917, %v951
    %v982 = vadd.f32 %v918, %v953
    %v983 = vadd.f32 %v919, %v955
    %v984 = vadd.f32 %v920, %v957
    %v985 = vadd.f32 %v921, %v959
    %v986 = vadd.f32 %v922, %v961
    %v987 = vadd.f32 %v923, %v963
    %v988 = vadd.f32 %v924, %v965
    %v989 = vadd.f32 %v925, %v967
    %v990 = vadd.f32 %v926, %v969
    %v991 = vadd.f32 %v927, %v971
    %v992 = vadd.f32 %v928, %v973
    %v993 = vadd.f32 %v929, %v975
    %v994 = vadd.f32 %v930, %v977
    %v995 = vadd.f32 %v931, %v979
    %996 = vst.msk [vmem:[#allocation4] sm:$0xff] %vm883, %v980
    %997 = vst.msk [vmem:[#allocation4 + $0x8] sm:$0xff] %vm883, %v981
    %998 = vst.msk [vmem:[#allocation4 + $0x10] sm:$0xff] %vm883, %v982
    %999 = vst.msk [vmem:[#allocation4 + $0x18] sm:$0xff] %vm883, %v983
    %1000 = vst.msk [vmem:[#allocation4 + $0x20] sm:$0xff] %vm883, %v984
    %1001 = vst.msk [vmem:[#allocation4 + $0x28] sm:$0xff] %vm883, %v985
    %1002 = vst.msk [vmem:[#allocation4 + $0x30] sm:$0xff] %vm883, %v986
    %1003 = vst.msk [vmem:[#allocation4 + $0x38] sm:$0xff] %vm883, %v987
    %1004 = vst.msk [vmem:[#allocation4 + $0x40] sm:$0xff] %vm883, %v988
    %1005 = vst.msk [vmem:[#allocation4 + $0x48] sm:$0xff] %vm883, %v989
    %1006 = vst.msk [vmem:[#allocation4 + $0x50] sm:$0xff] %vm883, %v990
    %1007 = vst.msk [vmem:[#allocation4 + $0x58] sm:$0xff] %vm883, %v991
    %1008 = vst.msk [vmem:[#allocation4 + $0x60] sm:$0xff] %vm883, %v992
    %1009 = vst.msk [vmem:[#allocation4 + $0x68] sm:$0xff] %vm883, %v993
    %1010 = vst.msk [vmem:[#allocation4 + $0x70] sm:$0xff] %vm883, %v994
    %1011 = vst.msk [vmem:[#allocation4 + $0x78] sm:$0xff] %vm883, %v995
    %v1012 = vld [vmem:[#allocation5] sm:$0xff]
    %v1013 = vld [vmem:[#allocation5 + $0x8] sm:$0xff]
    %v1014 = vld [vmem:[#allocation5 + $0x10] sm:$0xff]
    %v1015 = vld [vmem:[#allocation5 + $0x18] sm:$0xff]
    %v1016 = vld [vmem:[#allocation5 + $0x20] sm:$0xff]
    %v1017 = vld [vmem:[#allocation5 + $0x28] sm:$0xff]
    %v1018 = vld [vmem:[#allocation5 + $0x30] sm:$0xff]
    %v1019 = vld [vmem:[#allocation5 + $0x38] sm:$0xff]
    %v1020 = vld [vmem:[#allocation5 + $0x40] sm:$0xff]
    %v1021 = vld [vmem:[#allocation5 + $0x48] sm:$0xff]
    %v1022 = vld [vmem:[#allocation5 + $0x50] sm:$0xff]
    %v1023 = vld [vmem:[#allocation5 + $0x58] sm:$0xff]
    %v1024 = vld [vmem:[#allocation5 + $0x60] sm:$0xff]
    %v1025 = vld [vmem:[#allocation5 + $0x68] sm:$0xff]
    %v1026 = vld [vmem:[#allocation5 + $0x70] sm:$0xff]
    %v1027 = vld [vmem:[#allocation5 + $0x78] sm:$0xff]
    %1028 = vadd.xlane.f32.xlu0 %v515
    %v1029 = vpop.xlane.xlu0 %1028
    %1030 = vadd.xlane.f32.xlu0 %v516
    %v1031 = vpop.xlane.xlu0 %1030
    %1032 = vadd.xlane.f32.xlu0 %v517
    %v1033 = vpop.xlane.xlu0 %1032
    %1034 = vadd.xlane.f32.xlu0 %v518
    %v1035 = vpop.xlane.xlu0 %1034
    %1036 = vadd.xlane.f32.xlu0 %v519
    %v1037 = vpop.xlane.xlu0 %1036
    %1038 = vadd.xlane.f32.xlu0 %v520
    %v1039 = vpop.xlane.xlu0 %1038
    %1040 = vadd.xlane.f32.xlu0 %v521
    %v1041 = vpop.xlane.xlu0 %1040
    %1042 = vadd.xlane.f32.xlu0 %v522
    %v1043 = vpop.xlane.xlu0 %1042
    %1044 = vadd.xlane.f32.xlu0 %v523
    %v1045 = vpop.xlane.xlu0 %1044
    %1046 = vadd.xlane.f32.xlu0 %v524
    %v1047 = vpop.xlane.xlu0 %1046
    %1048 = vadd.xlane.f32.xlu0 %v525
    %v1049 = vpop.xlane.xlu0 %1048
    %1050 = vadd.xlane.f32.xlu0 %v526
    %v1051 = vpop.xlane.xlu0 %1050
    %1052 = vadd.xlane.f32.xlu0 %v527
    %v1053 = vpop.xlane.xlu0 %1052
    %1054 = vadd.xlane.f32.xlu0 %v528
    %v1055 = vpop.xlane.xlu0 %1054
    %1056 = vadd.xlane.f32.xlu0 %v529
    %v1057 = vpop.xlane.xlu0 %1056
    %1058 = vadd.xlane.f32.xlu0 %v530
    %v1059 = vpop.xlane.xlu0 %1058
    %v1060 = vadd.f32 %v1012, %v1029
    %v1061 = vadd.f32 %v1013, %v1031
    %v1062 = vadd.f32 %v1014, %v1033
    %v1063 = vadd.f32 %v1015, %v1035
    %v1064 = vadd.f32 %v1016, %v1037
    %v1065 = vadd.f32 %v1017, %v1039
    %v1066 = vadd.f32 %v1018, %v1041
    %v1067 = vadd.f32 %v1019, %v1043
    %v1068 = vadd.f32 %v1020, %v1045
    %v1069 = vadd.f32 %v1021, %v1047
    %v1070 = vadd.f32 %v1022, %v1049
    %v1071 = vadd.f32 %v1023, %v1051
    %v1072 = vadd.f32 %v1024, %v1053
    %v1073 = vadd.f32 %v1025, %v1055
    %v1074 = vadd.f32 %v1026, %v1057
    %v1075 = vadd.f32 %v1027, %v1059
    %1076 = vst.msk [vmem:[#allocation5] sm:$0xff] %vm883, %v1060
    %1077 = vst.msk [vmem:[#allocation5 + $0x8] sm:$0xff] %vm883, %v1061
    %1078 = vst.msk [vmem:[#allocation5 + $0x10] sm:$0xff] %vm883, %v1062
    %1079 = vst.msk [vmem:[#allocation5 + $0x18] sm:$0xff] %vm883, %v1063
    %1080 = vst.msk [vmem:[#allocation5 + $0x20] sm:$0xff] %vm883, %v1064
    %1081 = vst.msk [vmem:[#allocation5 + $0x28] sm:$0xff] %vm883, %v1065
    %1082 = vst.msk [vmem:[#allocation5 + $0x30] sm:$0xff] %vm883, %v1066
    %1083 = vst.msk [vmem:[#allocation5 + $0x38] sm:$0xff] %vm883, %v1067
    %1084 = vst.msk [vmem:[#allocation5 + $0x40] sm:$0xff] %vm883, %v1068
    %1085 = vst.msk [vmem:[#allocation5 + $0x48] sm:$0xff] %vm883, %v1069
    %1086 = vst.msk [vmem:[#allocation5 + $0x50] sm:$0xff] %vm883, %v1070
    %1087 = vst.msk [vmem:[#allocation5 + $0x58] sm:$0xff] %vm883, %v1071
    %1088 = vst.msk [vmem:[#allocation5 + $0x60] sm:$0xff] %vm883, %v1072
    %1089 = vst.msk [vmem:[#allocation5 + $0x68] sm:$0xff] %vm883, %v1073
    %1090 = vst.msk [vmem:[#allocation5 + $0x70] sm:$0xff] %vm883, %v1074
    %1091 = vst.msk [vmem:[#allocation5 + $0x78] sm:$0xff] %vm883, %v1075
    // Predicated region
    $region26: #{tpu_custom_call.1} parent=1 // pred_check
      %p1092 = pneg %p31
    $region27: #{tpu_custom_call.1} parent=1 // pred_check_branch
      %1094 = sbr.rel (%p1092) target = $region29
    $region28: #{tpu_custom_call.1} parent=1 // pred_region
      %v1095 = vld [vmem:[#allocation5] sm:$0xff]
      %v1096 = vld [vmem:[#allocation5 + $0x8] sm:$0xff]
      %v1097 = vld [vmem:[#allocation5 + $0x10] sm:$0xff]
      %v1098 = vld [vmem:[#allocation5 + $0x18] sm:$0xff]
      %v1099 = vld [vmem:[#allocation5 + $0x20] sm:$0xff]
      %v1100 = vld [vmem:[#allocation5 + $0x28] sm:$0xff]
      %v1101 = vld [vmem:[#allocation5 + $0x30] sm:$0xff]
      %v1102 = vld [vmem:[#allocation5 + $0x38] sm:$0xff]
      %v1103 = vld [vmem:[#allocation5 + $0x40] sm:$0xff]
      %v1104 = vld [vmem:[#allocation5 + $0x48] sm:$0xff]
      %v1105 = vld [vmem:[#allocation5 + $0x50] sm:$0xff]
      %v1106 = vld [vmem:[#allocation5 + $0x58] sm:$0xff]
      %v1107 = vld [vmem:[#allocation5 + $0x60] sm:$0xff]
      %v1108 = vld [vmem:[#allocation5 + $0x68] sm:$0xff]
      %v1109 = vld [vmem:[#allocation5 + $0x70] sm:$0xff]
      %v1110 = vld [vmem:[#allocation5 + $0x78] sm:$0xff]
      %v1111 = vld [vmem:[#allocation2] sm:$0xff]
      %v1112 = vld [vmem:[#allocation2 + $0x8] sm:$0xff]
      %v1113 = vld [vmem:[#allocation2 + $0x10] sm:$0xff]
      %v1114 = vld [vmem:[#allocation2 + $0x18] sm:$0xff]
      %v1115 = vld [vmem:[#allocation2 + $0x20] sm:$0xff]
      %v1116 = vld [vmem:[#allocation2 + $0x28] sm:$0xff]
      %v1117 = vld [vmem:[#allocation2 + $0x30] sm:$0xff]
      %v1118 = vld [vmem:[#allocation2 + $0x38] sm:$0xff]
      %v1119 = vld [vmem:[#allocation2 + $0x40] sm:$0xff]
      %v1120 = vld [vmem:[#allocation2 + $0x48] sm:$0xff]
      %v1121 = vld [vmem:[#allocation2 + $0x50] sm:$0xff]
      %v1122 = vld [vmem:[#allocation2 + $0x58] sm:$0xff]
      %v1123 = vld [vmem:[#allocation2 + $0x60] sm:$0xff]
      %v1124 = vld [vmem:[#allocation2 + $0x68] sm:$0xff]
      %v1125 = vld [vmem:[#allocation2 + $0x70] sm:$0xff]
      %v1126 = vld [vmem:[#allocation2 + $0x78] sm:$0xff]
      %v1127 = vld [vmem:[#allocation3] sm:$0xff]
      %v1128 = vld [vmem:[#allocation3 + $0x8] sm:$0xff]
      %v1129 = vld [vmem:[#allocation3 + $0x10] sm:$0xff]
      %v1130 = vld [vmem:[#allocation3 + $0x18] sm:$0xff]
      %v1131 = vld [vmem:[#allocation3 + $0x20] sm:$0xff]
      %v1132 = vld [vmem:[#allocation3 + $0x28] sm:$0xff]
      %v1133 = vld [vmem:[#allocation3 + $0x30] sm:$0xff]
      %v1134 = vld [vmem:[#allocation3 + $0x38] sm:$0xff]
      %v1135 = vld [vmem:[#allocation3 + $0x40] sm:$0xff]
      %v1136 = vld [vmem:[#allocation3 + $0x48] sm:$0xff]
      %v1137 = vld [vmem:[#allocation3 + $0x50] sm:$0xff]
      %v1138 = vld [vmem:[#allocation3 + $0x58] sm:$0xff]
      %v1139 = vld [vmem:[#allocation3 + $0x60] sm:$0xff]
      %v1140 = vld [vmem:[#allocation3 + $0x68] sm:$0xff]
      %v1141 = vld [vmem:[#allocation3 + $0x70] sm:$0xff]
      %v1142 = vld [vmem:[#allocation3 + $0x78] sm:$0xff]
      %v1143 = vlog2.pop %v1127
      %v1144 = vmul.f32 %v1143, 0.6931472
      %v1145 = vlog2.pop %v1128
      %v1146 = vmul.f32 %v1145, 0.6931472
      %v1147 = vlog2.pop %v1129
      %v1148 = vmul.f32 %v1147, 0.6931472
      %v1149 = vlog2.pop %v1130
      %v1150 = vmul.f32 %v1149, 0.6931472
      %v1151 = vlog2.pop %v1131
      %v1152 = vmul.f32 %v1151, 0.6931472
      %v1153 = vlog2.pop %v1132
      %v1154 = vmul.f32 %v1153, 0.6931472
      %v1155 = vlog2.pop %v1133
      %v1156 = vmul.f32 %v1155, 0.6931472
      %v1157 = vlog2.pop %v1134
      %v1158 = vmul.f32 %v1157, 0.6931472
      %v1159 = vlog2.pop %v1135
      %v1160 = vmul.f32 %v1159, 0.6931472
      %v1161 = vlog2.pop %v1136
      %v1162 = vmul.f32 %v1161, 0.6931472
      %v1163 = vlog2.pop %v1137
      %v1164 = vmul.f32 %v1163, 0.6931472
      %v1165 = vlog2.pop %v1138
      %v1166 = vmul.f32 %v1165, 0.6931472
      %v1167 = vlog2.pop %v1139
      %v1168 = vmul.f32 %v1167, 0.6931472
      %v1169 = vlog2.pop %v1140
      %v1170 = vmul.f32 %v1169, 0.6931472
      %v1171 = vlog2.pop %v1141
      %v1172 = vmul.f32 %v1171, 0.6931472
      %v1173 = vlog2.pop %v1142
      %v1174 = vmul.f32 %v1173, 0.6931472
      %v1175 = vadd.f32 %v1111, %v1144
      %v1176 = vadd.f32 %v1112, %v1146
      %v1177 = vadd.f32 %v1113, %v1148
      %v1178 = vadd.f32 %v1114, %v1150
      %v1179 = vadd.f32 %v1115, %v1152
      %v1180 = vadd.f32 %v1116, %v1154
      %v1181 = vadd.f32 %v1117, %v1156
      %v1182 = vadd.f32 %v1118, %v1158
      %v1183 = vadd.f32 %v1119, %v1160
      %v1184 = vadd.f32 %v1120, %v1162
      %v1185 = vadd.f32 %v1121, %v1164
      %v1186 = vadd.f32 %v1122, %v1166
      %v1187 = vadd.f32 %v1123, %v1168
      %v1188 = vadd.f32 %v1124, %v1170
      %v1189 = vadd.f32 %v1125, %v1172
      %v1190 = vadd.f32 %v1126, %v1174
      %v1191 = vld [vmem:[#allocation4] sm:$0xff]
      %v1192 = vld [vmem:[#allocation4 + $0x8] sm:$0xff]
      %v1193 = vld [vmem:[#allocation4 + $0x10] sm:$0xff]
      %v1194 = vld [vmem:[#allocation4 + $0x18] sm:$0xff]
      %v1195 = vld [vmem:[#allocation4 + $0x20] sm:$0xff]
      %v1196 = vld [vmem:[#allocation4 + $0x28] sm:$0xff]
      %v1197 = vld [vmem:[#allocation4 + $0x30] sm:$0xff]
      %v1198 = vld [vmem:[#allocation4 + $0x38] sm:$0xff]
      %v1199 = vld [vmem:[#allocation4 + $0x40] sm:$0xff]
      %v1200 = vld [vmem:[#allocation4 + $0x48] sm:$0xff]
      %v1201 = vld [vmem:[#allocation4 + $0x50] sm:$0xff]
      %v1202 = vld [vmem:[#allocation4 + $0x58] sm:$0xff]
      %v1203 = vld [vmem:[#allocation4 + $0x60] sm:$0xff]
      %v1204 = vld [vmem:[#allocation4 + $0x68] sm:$0xff]
      %v1205 = vld [vmem:[#allocation4 + $0x70] sm:$0xff]
      %v1206 = vld [vmem:[#allocation4 + $0x78] sm:$0xff]
      %v1207 = vrcp.pop %v1095
      %v1208 = vmul.f32 %v1191, %v1207
      %v1209 = vrcp.pop %v1096
      %v1210 = vmul.f32 %v1192, %v1209
      %v1211 = vrcp.pop %v1097
      %v1212 = vmul.f32 %v1193, %v1211
      %v1213 = vrcp.pop %v1098
      %v1214 = vmul.f32 %v1194, %v1213
      %v1215 = vrcp.pop %v1099
      %v1216 = vmul.f32 %v1195, %v1215
      %v1217 = vrcp.pop %v1100
      %v1218 = vmul.f32 %v1196, %v1217
      %v1219 = vrcp.pop %v1101
      %v1220 = vmul.f32 %v1197, %v1219
      %v1221 = vrcp.pop %v1102
      %v1222 = vmul.f32 %v1198, %v1221
      %v1223 = vrcp.pop %v1103
      %v1224 = vmul.f32 %v1199, %v1223
      %v1225 = vrcp.pop %v1104
      %v1226 = vmul.f32 %v1200, %v1225
      %v1227 = vrcp.pop %v1105
      %v1228 = vmul.f32 %v1201, %v1227
      %v1229 = vrcp.pop %v1106
      %v1230 = vmul.f32 %v1202, %v1229
      %v1231 = vrcp.pop %v1107
      %v1232 = vmul.f32 %v1203, %v1231
      %v1233 = vrcp.pop %v1108
      %v1234 = vmul.f32 %v1204, %v1233
      %v1235 = vrcp.pop %v1109
      %v1236 = vmul.f32 %v1205, %v1235
      %v1237 = vrcp.pop %v1110
      %v1238 = vmul.f32 %v1206, %v1237
      %v1239 = vsub.f32 %v1208, %v1175
      %v1240 = vsub.f32 %v1210, %v1176
      %v1241 = vsub.f32 %v1212, %v1177
      %v1242 = vsub.f32 %v1214, %v1178
      %v1243 = vsub.f32 %v1216, %v1179
      %v1244 = vsub.f32 %v1218, %v1180
      %v1245 = vsub.f32 %v1220, %v1181
      %v1246 = vsub.f32 %v1222, %v1182
      %v1247 = vsub.f32 %v1224, %v1183
      %v1248 = vsub.f32 %v1226, %v1184
      %v1249 = vsub.f32 %v1228, %v1185
      %v1250 = vsub.f32 %v1230, %v1186
      %v1251 = vsub.f32 %v1232, %v1187
      %v1252 = vsub.f32 %v1234, %v1188
      %v1253 = vsub.f32 %v1236, %v1189
      %v1254 = vsub.f32 %v1238, %v1190
      %v1255 = vmul.f32 %v1239, -1.0
      %v1256 = vmul.f32 %v1240, -1.0
      %v1257 = vmul.f32 %v1241, -1.0
      %v1258 = vmul.f32 %v1242, -1.0
      %v1259 = vmul.f32 %v1243, -1.0
      %v1260 = vmul.f32 %v1244, -1.0
      %v1261 = vmul.f32 %v1245, -1.0
      %v1262 = vmul.f32 %v1246, -1.0
      %v1263 = vmul.f32 %v1247, -1.0
      %v1264 = vmul.f32 %v1248, -1.0
      %v1265 = vmul.f32 %v1249, -1.0
      %v1266 = vmul.f32 %v1250, -1.0
      %v1267 = vmul.f32 %v1251, -1.0
      %v1268 = vmul.f32 %v1252, -1.0
      %v1269 = vmul.f32 %v1253, -1.0
      %v1270 = vmul.f32 %v1254, -1.0
      %vm1271 = vcmp.lt.s32.totalorder %v313, 16
      %vm1272 = vcmp.lt.s32.totalorder %v314, 16
      %vm1273 = vcmp.lt.s32.totalorder %v315, 16
      %vm1274 = vcmp.lt.s32.totalorder %v316, 16
      %vm1275 = vcmp.lt.s32.totalorder %v317, 16
      %vm1276 = vcmp.lt.s32.totalorder %v318, 16
      %vm1277 = vcmp.lt.s32.totalorder %v319, 16
      %vm1278 = vcmp.lt.s32.totalorder %v320, 16
      %vm1279 = vcmp.lt.s32.totalorder %v321, 16
      %vm1280 = vcmp.lt.s32.totalorder %v322, 16
      %vm1281 = vcmp.lt.s32.totalorder %v323, 16
      %vm1282 = vcmp.lt.s32.totalorder %v324, 16
      %vm1283 = vcmp.lt.s32.totalorder %v325, 16
      %vm1284 = vcmp.lt.s32.totalorder %v326, 16
      %vm1285 = vcmp.lt.s32.totalorder %v327, 16
      %vm1286 = vcmp.lt.s32.totalorder %v328, 16
      %vm1287 = vcmp.gt.f32.partialorder %v1095, 0.0
      %vm1288 = vcmp.gt.f32.partialorder %v1096, 0.0
      %vm1289 = vcmp.gt.f32.partialorder %v1097, 0.0
      %vm1290 = vcmp.gt.f32.partialorder %v1098, 0.0
      %vm1291 = vcmp.gt.f32.partialorder %v1099, 0.0
      %vm1292 = vcmp.gt.f32.partialorder %v1100, 0.0
      %vm1293 = vcmp.gt.f32.partialorder %v1101, 0.0
      %vm1294 = vcmp.gt.f32.partialorder %v1102, 0.0
      %vm1295 = vcmp.gt.f32.partialorder %v1103, 0.0
      %vm1296 = vcmp.gt.f32.partialorder %v1104, 0.0
      %vm1297 = vcmp.gt.f32.partialorder %v1105, 0.0
      %vm1298 = vcmp.gt.f32.partialorder %v1106, 0.0
      %vm1299 = vcmp.gt.f32.partialorder %v1107, 0.0
      %vm1300 = vcmp.gt.f32.partialorder %v1108, 0.0
      %vm1301 = vcmp.gt.f32.partialorder %v1109, 0.0
      %vm1302 = vcmp.gt.f32.partialorder %v1110, 0.0
      %vm1303 = vmand %vm1271, %vm1287
      %vm1304 = vmand %vm1272, %vm1288
      %vm1305 = vmand %vm1273, %vm1289
      %vm1306 = vmand %vm1274, %vm1290
      %vm1307 = vmand %vm1275, %vm1291
      %vm1308 = vmand %vm1276, %vm1292
      %vm1309 = vmand %vm1277, %vm1293
      %vm1310 = vmand %vm1278, %vm1294
      %vm1311 = vmand %vm1279, %vm1295
      %vm1312 = vmand %vm1280, %vm1296
      %vm1313 = vmand %vm1281, %vm1297
      %vm1314 = vmand %vm1282, %vm1298
      %vm1315 = vmand %vm1283, %vm1299
      %vm1316 = vmand %vm1284, %vm1300
      %vm1317 = vmand %vm1285, %vm1301
      %vm1318 = vmand %vm1286, %vm1302
      %v1319 = vsel %vm1303, %v1255, 0.0
      %v1320 = vsel %vm1304, %v1256, 0.0
      %v1321 = vsel %vm1305, %v1257, 0.0
      %v1322 = vsel %vm1306, %v1258, 0.0
      %v1323 = vsel %vm1307, %v1259, 0.0
      %v1324 = vsel %vm1308, %v1260, 0.0
      %v1325 = vsel %vm1309, %v1261, 0.0
      %v1326 = vsel %vm1310, %v1262, 0.0
      %v1327 = vsel %vm1311, %v1263, 0.0
      %v1328 = vsel %vm1312, %v1264, 0.0
      %v1329 = vsel %vm1313, %v1265, 0.0
      %v1330 = vsel %vm1314, %v1266, 0.0
      %v1331 = vsel %vm1315, %v1267, 0.0
      %v1332 = vsel %vm1316, %v1268, 0.0
      %v1333 = vsel %vm1317, %v1269, 0.0
      %v1334 = vsel %vm1318, %v1270, 0.0
      %1335 = vst.msk [vmem:[%s4] sm:$0xff] %vm883, %v1319
      %1336 = vst.msk [vmem:[%s4 + $0x8] sm:$0xff] %vm883, %v1320
      %1337 = vst.msk [vmem:[%s4 + $0x10] sm:$0xff] %vm883, %v1321
      %1338 = vst.msk [vmem:[%s4 + $0x18] sm:$0xff] %vm883, %v1322
      %1339 = vst.msk [vmem:[%s4 + $0x20] sm:$0xff] %vm883, %v1323
      %1340 = vst.msk [vmem:[%s4 + $0x28] sm:$0xff] %vm883, %v1324
      %1341 = vst.msk [vmem:[%s4 + $0x30] sm:$0xff] %vm883, %v1325
      %1342 = vst.msk [vmem:[%s4 + $0x38] sm:$0xff] %vm883, %v1326
      %1343 = vst.msk [vmem:[%s4 + $0x40] sm:$0xff] %vm883, %v1327
      %1344 = vst.msk [vmem:[%s4 + $0x48] sm:$0xff] %vm883, %v1328
      %1345 = vst.msk [vmem:[%s4 + $0x50] sm:$0xff] %vm883, %v1329
      %1346 = vst.msk [vmem:[%s4 + $0x58] sm:$0xff] %vm883, %v1330
      %1347 = vst.msk [vmem:[%s4 + $0x60] sm:$0xff] %vm883, %v1331
      %1348 = vst.msk [vmem:[%s4 + $0x68] sm:$0xff] %vm883, %v1332
      %1349 = vst.msk [vmem:[%s4 + $0x70] sm:$0xff] %vm883, %v1333
      %1350 = vst.msk [vmem:[%s4 + $0x78] sm:$0xff] %vm883, %v1334
    $region29: #{tpu_custom_call.1} parent=1 // pred_fallthru
      _
    // Predicated region
    $region30: #{tpu_custom_call.1} parent=1 // pred_check
      _
    $region31: #{tpu_custom_call.1} parent=1 // pred_check_branch
      %1352 = sbr.rel (0) target = $region33
    $region32: #{tpu_custom_call.1} parent=1 // pred_region
      _
    $region33: #{tpu_custom_call.1} parent=1 // pred_fallthru
      _
    // Predicated region
    $region34: #{tpu_custom_call.1} parent=1 // pred_check
      _
    $region35: #{tpu_custom_call.1} parent=1 // pred_check_branch
      %1354 = sbr.rel (0) target = $region37
    $region36: #{tpu_custom_call.1} parent=1 // pred_region
      _
    $region37: #{tpu_custom_call.1} parent=1 // pred_fallthru
      _
    %1355 = vsyncpa [#allocation7], 1

</llo_original>
